<compile_context>
chip_gen: v7x
topology: tpu7x:2x2x1
jax: 0.10.0
libtpu: 0.0.40
codegen_flags: <defaults>
</compile_context>

<pallas_src>
import jax
import jax.numpy as jnp
from jax import lax
from jax.experimental import pallas as pl
from jax.experimental.pallas import tpu as pltpu

# ---- model hyper-params (small TPU-friendly analogue of the PyTorch module) ----
EMBEDDING_SIZE = 128          # PyTorch hard-codes 500; pad to 512 for full fidelity
NUM_FILTERS = 10
WINDOW_SIZES = (1, 2, 3, 5)
NUM_CLASSES = 4
VOCAB = 32
BATCH = 2
SEQ_LEN = 8

W_MAX = max(WINDOW_SIZES)
PAD = W_MAX - 1               # zero padding on each side for the widest window
T = SEQ_LEN + W_MAX - 1       # real conv output length for the widest window (12)
T_PAD = 16                    # padded so B_BLK*T_PAD = 128 (MXU-friendly, 8-aligned)
VOCAB_PAD = 128               # lane-dense one-hot / table rows
NF_PAD = 128                  # lane-dense packed filter dim (4 branches * 10 -> 128)
C_PAD = 128                   # lane-dense class dim (4 -> 128)
B_BLK = 8                     # batch rows per grid step (sublane aligned)
NEG = -1e30                   # additive mask value (finite: no inf/NaN hazards)
MXU_DTYPE = jnp.float32       # set to jnp.bfloat16 on v6e/v7x at scale (f32 accum)

E = EMBEDDING_SIZE


# ------------------------------- fused kernel ----------------------------------
def _cnn_fused_kernel(gidx_ref,   # (W_MAX, B_BLK*T_PAD, 1) int32  shifted token ids (-1 = pad)
                      tab_ref,    # (VOCAB_PAD, E)                 embedding table (zero-padded rows)
                      rhs_ref,    # (W_MAX*E, NF_PAD)              packed conv weights (per tap)
                      cb_ref,     # (1, NF_PAD)                    packed conv bias
                      tmask_ref,  # (1, T_PAD, NF_PAD)             additive time-validity mask
                      lw_ref,     # (NF_PAD, C_PAD)                packed linear weight
                      lb_ref,     # (1, C_PAD)                     packed linear bias
                      cmask_ref,  # (1, C_PAD)                     additive class mask
                      out_ref):   # (B_BLK, C_PAD)                 class probabilities
    BT = B_BLK * T_PAD
    lane_v = lax.broadcasted_iota(jnp.int32, (BT, VOCAB_PAD), 1)
    tab = tab_ref[...]

    # Embedding gather + convolution, fully vectorized: for each tap j the
    # one-hot of the (pre-shifted) token id selects the embedding row via an
    # MXU matmul (id == -1 selects nothing -> the conv's zero padding), and a
    # second matmul applies that tap's packed weights.  No scatter, no scratch.
    conv = jnp.zeros((BT, NF_PAD), jnp.float32)
    for j in range(W_MAX):
        oh = (gidx_ref[j] == lane_v).astype(MXU_DTYPE)              # (BT, VOCAB_PAD)
        emb_j = jnp.dot(oh, tab, preferred_element_type=jnp.float32)  # (BT, E)
        w_j = rhs_ref[j * E:(j + 1) * E, :]                          # (E, NF_PAD)
        conv = conv + jnp.dot(emb_j.astype(MXU_DTYPE), w_j,
                              preferred_element_type=jnp.float32)    # (BT, NF_PAD)

    # Bias + tanh, then masked max-pool over time (precomputed additive mask
    # covers each branch's valid conv length and the T_PAD tail).
    act = jnp.tanh(conv + cb_ref[...])
    act = act.reshape(B_BLK, T_PAD, NF_PAD) + tmask_ref[...]
    pooled = jnp.max(act, axis=1)                                    # (B_BLK, NF_PAD)

    # Linear head + exact softmax over the real classes (padded lanes masked).
    logits = jnp.dot(pooled.astype(MXU_DTYPE), lw_ref[...],
                     preferred_element_type=jnp.float32)
    logits = logits + lb_ref[...] + cmask_ref[...]
    m = jnp.max(logits, axis=-1, keepdims=True)
    e = jnp.exp(logits - m)
    s = jnp.sum(e, axis=-1, keepdims=True)
    out_ref[...] = e / s


# -------------------------------- parameters -----------------------------------
def init_params(key):
    n_keys = 2 + 2 * len(WINDOW_SIZES) + 2
    keys = jax.random.split(key, n_keys)
    params = {
        "emb": jax.random.normal(keys[0], (VOCAB, E), jnp.float32) * 0.1,
        "conv_w": [],
        "conv_b": [],
    }
    ki = 1
    for w in WINDOW_SIZES:
        params["conv_w"].append(
            jax.random.normal(keys[ki], (w, E, NUM_FILTERS), jnp.float32) * 0.05)
        params["conv_b"].append(
            jax.random.normal(keys[ki + 1], (1, NUM_FILTERS), jnp.float32) * 0.05)
        ki += 2
    params["lin_w"] = jax.random.normal(
        keys[ki], (len(WINDOW_SIZES) * NUM_FILTERS, NUM_CLASSES), jnp.float32) * 0.1
    params["lin_b"] = jax.random.normal(keys[ki + 1], (1, NUM_CLASSES), jnp.float32) * 0.1
    return params


def pack_params(params):
    """Pack weights lane-dense and precompute the additive masks."""
    nf = NUM_FILTERS
    tab = jnp.zeros((VOCAB_PAD, E), jnp.float32).at[:VOCAB].set(params["emb"])
    rhs = jnp.zeros((W_MAX * E, NF_PAD), jnp.float32)
    cb = jnp.zeros((1, NF_PAD), jnp.float32)
    tmask = jnp.zeros((1, T_PAD, NF_PAD), jnp.float32)
    t_ar = jnp.arange(T_PAD)
    for i, w in enumerate(WINDOW_SIZES):
        for k in range(w):
            j = (W_MAX - w) + k            # tap position within the max-padded window
            rhs = rhs.at[j * E:(j + 1) * E, i * nf:(i + 1) * nf].set(params["conv_w"][i][k])
        cb = cb.at[0, i * nf:(i + 1) * nf].set(params["conv_b"][i][0])
        vlen = SEQ_LEN + w - 1             # valid conv output length for this branch
        col = jnp.where(t_ar < vlen, 0.0, NEG)                  # (T_PAD,)
        tmask = tmask.at[0, :, i * nf:(i + 1) * nf].set(
            jnp.broadcast_to(col[:, None], (T_PAD, nf)))
    lw = jnp.zeros((NF_PAD, C_PAD), jnp.float32)
    lw = lw.at[:len(WINDOW_SIZES) * nf, :NUM_CLASSES].set(params["lin_w"])
    lb = jnp.zeros((1, C_PAD), jnp.float32).at[0, :NUM_CLASSES].set(params["lin_b"][0])
    cmask = jnp.where(jnp.arange(C_PAD) < NUM_CLASSES, 0.0, NEG)
    cmask = cmask.reshape(1, C_PAD).astype(jnp.float32)
    # bf16 option for v6e/v7x: MXU operands only, accumulation stays f32.
    tab = tab.astype(MXU_DTYPE)
    rhs = rhs.astype(MXU_DTYPE)
    lw = lw.astype(MXU_DTYPE)
    return {"tab": tab, "rhs": rhs, "cbias": cb, "tmask": tmask,
            "lw": lw, "lb": lb, "cmask": cmask}


# --------------------------------- forward --------------------------------------
@jax.jit
def cnn_forward(x, packed):
    B, L = x.shape
    assert L == SEQ_LEN
    n_blk = pl.cdiv(B, B_BLK)              # no forced extra grid steps (v5e/v6e)
    b_pad = n_blk * B_BLK
    ids = jnp.zeros((b_pad, SEQ_LEN), jnp.int32).at[:B].set(x.astype(jnp.int32))

    # Tiny integer preprocessing: shifted-token-id table gidx[j, b*T_PAD+t] =
    # ids[b, t - PAD + j] (or -1 outside the sequence -> zero embedding row).
    # This bakes the conv's im2col time shift into the in-kernel one-hot gather.
    t_idx = jnp.arange(T_PAD)[:, None]
    j_idx = jnp.arange(W_MAX)[None, :]
    l = t_idx - PAD + j_idx                                   # (T_PAD, W_MAX)
    valid = (l >= 0) & (l < SEQ_LEN)
    lc = jnp.clip(l, 0, SEQ_LEN - 1)
    gathered = jnp.take(ids, lc.reshape(-1), axis=1).reshape(b_pad, T_PAD, W_MAX)
    gidx = jnp.where(valid[None, :, :], gathered, -1)
    gidx = jnp.transpose(gidx, (2, 0, 1)).reshape(W_MAX, b_pad * T_PAD, 1)
    gidx = gidx.astype(jnp.int32)

    probs_pad = pl.pallas_call(
        _cnn_fused_kernel,
        out_shape=jax.ShapeDtypeStruct((b_pad, C_PAD), jnp.float32),
        grid=(n_blk,),
        in_specs=[
            pl.BlockSpec((W_MAX, B_BLK * T_PAD, 1), lambda i: (0, i, 0)),   # gidx
            pl.BlockSpec((VOCAB_PAD, E), lambda i: (0, 0)),                  # table
            pl.BlockSpec((W_MAX * E, NF_PAD), lambda i: (0, 0)),             # rhs
            pl.BlockSpec((1, NF_PAD), lambda i: (0, 0)),                     # conv bias
            pl.BlockSpec((1, T_PAD, NF_PAD), lambda i: (0, 0, 0)),           # time mask
            pl.BlockSpec((NF_PAD, C_PAD), lambda i: (0, 0)),                 # linear w
            pl.BlockSpec((1, C_PAD), lambda i: (0, 0)),                      # linear b
            pl.BlockSpec((1, C_PAD), lambda i: (0, 0)),                      # class mask
        ],
        out_specs=pl.BlockSpec((B_BLK, C_PAD), lambda i: (i, 0)),
        compiler_params=pltpu.CompilerParams(dimension_semantics=("parallel",)),
    )(gidx, packed["tab"], packed["rhs"], packed["cbias"], packed["tmask"],
      packed["lw"], packed["lb"], packed["cmask"])

    return probs_pad[:B, :NUM_CLASSES]


def cnn_forward_ref(x, params):
    """Pure-JAX reference mirroring the PyTorch forward, for verification."""
    emb = jnp.take(params["emb"], x, axis=0)
    pooled = []
    for i, w in enumerate(WINDOW_SIZES):
        emb_pad = jnp.pad(emb, ((0, 0), (w - 1, w - 1), (0, 0)))
        Tw = emb_pad.shape[1] - (w - 1)
        conv = jnp.zeros((x.shape[0], Tw, NUM_FILTERS), jnp.float32)
        for k in range(w):
            conv = conv + jnp.einsum("ble,ef->blf", emb_pad[:, k:k + Tw, :],
                                     params["conv_w"][i][k])
        conv = jnp.tanh(conv + params["conv_b"][i][:, None, :])
        pooled.append(jnp.max(conv, axis=1))
    feat = jnp.concatenate(pooled, axis=1)
    logits = feat @ params["lin_w"] + params["lin_b"]
    return jax.nn.softmax(logits, axis=-1)


if __name__ == "__main__":
    key = jax.random.PRNGKey(0)
    pkey, xkey = jax.random.split(key)
    params = init_params(pkey)
    packed = pack_params(params)
    x = jax.random.randint(xkey, (BATCH, SEQ_LEN), 0, VOCAB, dtype=jnp.int32)

    probs = jax.block_until_ready(cnn_forward(x, packed))
    ref = cnn_forward_ref(x, params)

    assert probs.shape == (BATCH, NUM_CLASSES)
    assert jnp.allclose(jnp.sum(probs, axis=-1), 1.0, atol=1e-3)
    assert jnp.allclose(probs, ref, atol=2e-3, rtol=2e-3)

    print("KERNEL_OK")
</pallas_src>

<mosaic_0001>
module attributes {stable_mosaic.version = 11 : i64} {
  func.func @_cnn_fused_kernel(%arg0: i32, %arg1: memref<5x128x1xi32, #tpu.memory_space<vmem>>, %arg2: memref<128x128xf32, #tpu.memory_space<vmem>>, %arg3: memref<640x128xf32, #tpu.memory_space<vmem>>, %arg4: memref<1x128xf32, #tpu.memory_space<vmem>>, %arg5: memref<1x16x128xf32, #tpu.memory_space<vmem>>, %arg6: memref<128x128xf32, #tpu.memory_space<vmem>>, %arg7: memref<1x128xf32, #tpu.memory_space<vmem>>, %arg8: memref<1x128xf32, #tpu.memory_space<vmem>>, %arg9: memref<8x128xf32, #tpu.memory_space<vmem>>) attributes {dimension_semantics = [#tpu.dimension_semantics<parallel>], iteration_bounds = array<i64: 1>, scalar_prefetch = 0 : i64, scratch_operands = 0 : i64, tpu.core_type = #tpu.core_type<tc>, window_params = [{transform_indices = @transform_0, window_bounds = array<i64: 5, 128, 1>}, {pipeline_mode = #tpu.pipeline_mode<synchronous>, transform_indices = @transform_1, window_bounds = array<i64: 128, 128>}, {pipeline_mode = #tpu.pipeline_mode<synchronous>, transform_indices = @transform_2, window_bounds = array<i64: 640, 128>}, {pipeline_mode = #tpu.pipeline_mode<synchronous>, transform_indices = @transform_3, window_bounds = array<i64: 1, 128>}, {pipeline_mode = #tpu.pipeline_mode<synchronous>, transform_indices = @transform_4, window_bounds = array<i64: 1, 16, 128>}, {pipeline_mode = #tpu.pipeline_mode<synchronous>, transform_indices = @transform_5, window_bounds = array<i64: 128, 128>}, {pipeline_mode = #tpu.pipeline_mode<synchronous>, transform_indices = @transform_6, window_bounds = array<i64: 1, 128>}, {pipeline_mode = #tpu.pipeline_mode<synchronous>, transform_indices = @transform_7, window_bounds = array<i64: 1, 128>}, {transform_indices = @transform_8, window_bounds = array<i64: 8, 128>}]} {
    %0 = tpu.iota {dimensions = array<i32: 1>} : vector<128x128xi32>
    %c0 = arith.constant 0 : index
    %c0_0 = arith.constant 0 : index
    %1 = vector.load %arg2[%c0, %c0_0] : memref<128x128xf32, #tpu.memory_space<vmem>>, vector<128x128xf32>
    %cst = arith.constant 0.000000e+00 : f32
    %2 = vector.broadcast %cst : f32 to vector<128x128xf32>
    %c0_1 = arith.constant 0 : index
    %c0_2 = arith.constant 0 : index
    %c0_3 = arith.constant 0 : index
    %3 = vector.load %arg1[%c0_1, %c0_2, %c0_3] : memref<5x128x1xi32, #tpu.memory_space<vmem>>, vector<1x128x1xi32>
    %4 = vector.shape_cast %3 : vector<1x128x1xi32> to vector<128x1xi32>
    %5 = vector.broadcast %4 : vector<128x1xi32> to vector<128x128xi32>
    %6 = arith.cmpi eq, %5, %0 : vector<128x128xi32>
    %7 = arith.extui %6 : vector<128x128xi1> to vector<128x128xi32>
    %8 = arith.sitofp %7 : vector<128x128xi32> to vector<128x128xf32>
    %cst_4 = arith.constant dense<0.000000e+00> : vector<128x128xf32>
    %9 = tpu.matmul %8, %1, %cst_4 {dimension_numbers = #tpu.dot_dimension_numbers<[1], [0], [0], [1], [0, 0, 1, 1], [], []>} : vector<128x128xf32>, vector<128x128xf32>, vector<128x128xf32> -> vector<128x128xf32>
    %c0_5 = arith.constant 0 : index
    %c0_6 = arith.constant 0 : index
    %10 = vector.load %arg3[%c0_5, %c0_6] : memref<640x128xf32, #tpu.memory_space<vmem>>, vector<128x128xf32>
    %cst_7 = arith.constant dense<0.000000e+00> : vector<128x128xf32>
    %11 = tpu.matmul %9, %10, %cst_7 {dimension_numbers = #tpu.dot_dimension_numbers<[1], [0], [0], [1], [0, 0, 1, 1], [], []>} : vector<128x128xf32>, vector<128x128xf32>, vector<128x128xf32> -> vector<128x128xf32>
    %12 = arith.addf %2, %11 : vector<128x128xf32>
    %c1 = arith.constant 1 : index
    %c0_8 = arith.constant 0 : index
    %c0_9 = arith.constant 0 : index
    %13 = vector.load %arg1[%c1, %c0_8, %c0_9] : memref<5x128x1xi32, #tpu.memory_space<vmem>>, vector<1x128x1xi32>
    %14 = vector.shape_cast %13 : vector<1x128x1xi32> to vector<128x1xi32>
    %15 = vector.broadcast %14 : vector<128x1xi32> to vector<128x128xi32>
    %16 = arith.cmpi eq, %15, %0 : vector<128x128xi32>
    %17 = arith.extui %16 : vector<128x128xi1> to vector<128x128xi32>
    %18 = arith.sitofp %17 : vector<128x128xi32> to vector<128x128xf32>
    %cst_10 = arith.constant dense<0.000000e+00> : vector<128x128xf32>
    %19 = tpu.matmul %18, %1, %cst_10 {dimension_numbers = #tpu.dot_dimension_numbers<[1], [0], [0], [1], [0, 0, 1, 1], [], []>} : vector<128x128xf32>, vector<128x128xf32>, vector<128x128xf32> -> vector<128x128xf32>
    %c128 = arith.constant 128 : index
    %c0_11 = arith.constant 0 : index
    %20 = vector.load %arg3[%c128, %c0_11] : memref<640x128xf32, #tpu.memory_space<vmem>>, vector<128x128xf32>
    %cst_12 = arith.constant dense<0.000000e+00> : vector<128x128xf32>
    %21 = tpu.matmul %19, %20, %cst_12 {dimension_numbers = #tpu.dot_dimension_numbers<[1], [0], [0], [1], [0, 0, 1, 1], [], []>} : vector<128x128xf32>, vector<128x128xf32>, vector<128x128xf32> -> vector<128x128xf32>
    %22 = arith.addf %12, %21 : vector<128x128xf32>
    %c2 = arith.constant 2 : index
    %c0_13 = arith.constant 0 : index
    %c0_14 = arith.constant 0 : index
    %23 = vector.load %arg1[%c2, %c0_13, %c0_14] : memref<5x128x1xi32, #tpu.memory_space<vmem>>, vector<1x128x1xi32>
    %24 = vector.shape_cast %23 : vector<1x128x1xi32> to vector<128x1xi32>
    %25 = vector.broadcast %24 : vector<128x1xi32> to vector<128x128xi32>
    %26 = arith.cmpi eq, %25, %0 : vector<128x128xi32>
    %27 = arith.extui %26 : vector<128x128xi1> to vector<128x128xi32>
    %28 = arith.sitofp %27 : vector<128x128xi32> to vector<128x128xf32>
    %cst_15 = arith.constant dense<0.000000e+00> : vector<128x128xf32>
    %29 = tpu.matmul %28, %1, %cst_15 {dimension_numbers = #tpu.dot_dimension_numbers<[1], [0], [0], [1], [0, 0, 1, 1], [], []>} : vector<128x128xf32>, vector<128x128xf32>, vector<128x128xf32> -> vector<128x128xf32>
    %c256 = arith.constant 256 : index
    %c0_16 = arith.constant 0 : index
    %30 = vector.load %arg3[%c256, %c0_16] : memref<640x128xf32, #tpu.memory_space<vmem>>, vector<128x128xf32>
    %cst_17 = arith.constant dense<0.000000e+00> : vector<128x128xf32>
    %31 = tpu.matmul %29, %30, %cst_17 {dimension_numbers = #tpu.dot_dimension_numbers<[1], [0], [0], [1], [0, 0, 1, 1], [], []>} : vector<128x128xf32>, vector<128x128xf32>, vector<128x128xf32> -> vector<128x128xf32>
    %32 = arith.addf %22, %31 : vector<128x128xf32>
    %c3 = arith.constant 3 : index
    %c0_18 = arith.constant 0 : index
    %c0_19 = arith.constant 0 : index
    %33 = vector.load %arg1[%c3, %c0_18, %c0_19] : memref<5x128x1xi32, #tpu.memory_space<vmem>>, vector<1x128x1xi32>
    %34 = vector.shape_cast %33 : vector<1x128x1xi32> to vector<128x1xi32>
    %35 = vector.broadcast %34 : vector<128x1xi32> to vector<128x128xi32>
    %36 = arith.cmpi eq, %35, %0 : vector<128x128xi32>
    %37 = arith.extui %36 : vector<128x128xi1> to vector<128x128xi32>
    %38 = arith.sitofp %37 : vector<128x128xi32> to vector<128x128xf32>
    %cst_20 = arith.constant dense<0.000000e+00> : vector<128x128xf32>
    %39 = tpu.matmul %38, %1, %cst_20 {dimension_numbers = #tpu.dot_dimension_numbers<[1], [0], [0], [1], [0, 0, 1, 1], [], []>} : vector<128x128xf32>, vector<128x128xf32>, vector<128x128xf32> -> vector<128x128xf32>
    %c384 = arith.constant 384 : index
    %c0_21 = arith.constant 0 : index
    %40 = vector.load %arg3[%c384, %c0_21] : memref<640x128xf32, #tpu.memory_space<vmem>>, vector<128x128xf32>
    %cst_22 = arith.constant dense<0.000000e+00> : vector<128x128xf32>
    %41 = tpu.matmul %39, %40, %cst_22 {dimension_numbers = #tpu.dot_dimension_numbers<[1], [0], [0], [1], [0, 0, 1, 1], [], []>} : vector<128x128xf32>, vector<128x128xf32>, vector<128x128xf32> -> vector<128x128xf32>
    %42 = arith.addf %32, %41 : vector<128x128xf32>
    %c4 = arith.constant 4 : index
    %c0_23 = arith.constant 0 : index
    %c0_24 = arith.constant 0 : index
    %43 = vector.load %arg1[%c4, %c0_23, %c0_24] : memref<5x128x1xi32, #tpu.memory_space<vmem>>, vector<1x128x1xi32>
    %44 = vector.shape_cast %43 : vector<1x128x1xi32> to vector<128x1xi32>
    %45 = vector.broadcast %44 : vector<128x1xi32> to vector<128x128xi32>
    %46 = arith.cmpi eq, %45, %0 : vector<128x128xi32>
    %47 = arith.extui %46 : vector<128x128xi1> to vector<128x128xi32>
    %48 = arith.sitofp %47 : vector<128x128xi32> to vector<128x128xf32>
    %cst_25 = arith.constant dense<0.000000e+00> : vector<128x128xf32>
    %49 = tpu.matmul %48, %1, %cst_25 {dimension_numbers = #tpu.dot_dimension_numbers<[1], [0], [0], [1], [0, 0, 1, 1], [], []>} : vector<128x128xf32>, vector<128x128xf32>, vector<128x128xf32> -> vector<128x128xf32>
    %c512 = arith.constant 512 : index
    %c0_26 = arith.constant 0 : index
    %50 = vector.load %arg3[%c512, %c0_26] : memref<640x128xf32, #tpu.memory_space<vmem>>, vector<128x128xf32>
    %cst_27 = arith.constant dense<0.000000e+00> : vector<128x128xf32>
    %51 = tpu.matmul %49, %50, %cst_27 {dimension_numbers = #tpu.dot_dimension_numbers<[1], [0], [0], [1], [0, 0, 1, 1], [], []>} : vector<128x128xf32>, vector<128x128xf32>, vector<128x128xf32> -> vector<128x128xf32>
    %52 = arith.addf %42, %51 : vector<128x128xf32>
    %c0_28 = arith.constant 0 : index
    %c0_29 = arith.constant 0 : index
    %53 = vector.load %arg4[%c0_28, %c0_29] : memref<1x128xf32, #tpu.memory_space<vmem>>, vector<1x128xf32>
    %54 = vector.broadcast %53 : vector<1x128xf32> to vector<128x128xf32>
    %55 = arith.addf %52, %54 : vector<128x128xf32>
    %56 = math.tanh %55 : vector<128x128xf32>
    %57 = vector.shape_cast %56 : vector<128x128xf32> to vector<8x16x128xf32>
    %c0_30 = arith.constant 0 : index
    %c0_31 = arith.constant 0 : index
    %c0_32 = arith.constant 0 : index
    %58 = vector.load %arg5[%c0_30, %c0_31, %c0_32] : memref<1x16x128xf32, #tpu.memory_space<vmem>>, vector<1x16x128xf32>
    %59 = vector.broadcast %58 : vector<1x16x128xf32> to vector<8x16x128xf32>
    %60 = arith.addf %57, %59 : vector<8x16x128xf32>
    %cst_33 = arith.constant dense<0xFF800000> : vector<8x128xf32>
    %61 = vector.multi_reduction <maximumf>, %60, %cst_33 [1] : vector<8x16x128xf32> to vector<8x128xf32>
    %c0_34 = arith.constant 0 : index
    %c0_35 = arith.constant 0 : index
    %62 = vector.load %arg6[%c0_34, %c0_35] : memref<128x128xf32, #tpu.memory_space<vmem>>, vector<128x128xf32>
    %cst_36 = arith.constant dense<0.000000e+00> : vector<8x128xf32>
    %63 = tpu.matmul %61, %62, %cst_36 {dimension_numbers = #tpu.dot_dimension_numbers<[1], [0], [0], [1], [0, 0, 1, 1], [], []>} : vector<8x128xf32>, vector<128x128xf32>, vector<8x128xf32> -> vector<8x128xf32>
    %c0_37 = arith.constant 0 : index
    %c0_38 = arith.constant 0 : index
    %64 = vector.load %arg7[%c0_37, %c0_38] : memref<1x128xf32, #tpu.memory_space<vmem>>, vector<1x128xf32>
    %65 = vector.broadcast %64 : vector<1x128xf32> to vector<8x128xf32>
    %66 = arith.addf %63, %65 : vector<8x128xf32>
    %c0_39 = arith.constant 0 : index
    %c0_40 = arith.constant 0 : index
    %67 = vector.load %arg8[%c0_39, %c0_40] : memref<1x128xf32, #tpu.memory_space<vmem>>, vector<1x128xf32>
    %68 = vector.broadcast %67 : vector<1x128xf32> to vector<8x128xf32>
    %69 = arith.addf %66, %68 : vector<8x128xf32>
    %cst_41 = arith.constant dense<0xFF800000> : vector<8xf32>
    %70 = vector.multi_reduction <maximumf>, %69, %cst_41 [1] : vector<8x128xf32> to vector<8xf32>
    %71 = vector.shape_cast %70 : vector<8xf32> to vector<8x1xf32>
    %72 = vector.broadcast %71 : vector<8x1xf32> to vector<8x128xf32>
    %73 = arith.subf %69, %72 : vector<8x128xf32>
    %74 = math.exp %73 : vector<8x128xf32>
    %cst_42 = arith.constant dense<0.000000e+00> : vector<8xf32>
    %75 = vector.multi_reduction <add>, %74, %cst_42 [1] : vector<8x128xf32> to vector<8xf32>
    %76 = vector.shape_cast %75 : vector<8xf32> to vector<8x1xf32>
    %77 = vector.broadcast %76 : vector<8x1xf32> to vector<8x128xf32>
    %78 = arith.divf %74, %77 : vector<8x128xf32>
    %c0_43 = arith.constant 0 : index
    %c0_44 = arith.constant 0 : index
    %79 = vector.load %arg9[%c0_43, %c0_44] : memref<8x128xf32, #tpu.memory_space<vmem>>, vector<8x128xf32>
    tpu.vector_store %arg9[%c0_43, %c0_44], %78 {strides = array<i32>} : memref<8x128xf32, #tpu.memory_space<vmem>>, vector<8x128xf32>,
    return
  }
  func.func @transform_0(%arg0: i32) -> (i32, i32, i32) {
    %c0_i32 = arith.constant 0 : i32
    %c0_i32_0 = arith.constant 0 : i32
    %c0_i32_1 = arith.constant 0 : i32
    return %c0_i32, %arg0, %c0_i32_0 : i32, i32, i32
  }
  func.func @transform_1(%arg0: i32) -> (i32, i32) {
    %c0_i32 = arith.constant 0 : i32
    %c0_i32_0 = arith.constant 0 : i32
    %c0_i32_1 = arith.constant 0 : i32
    return %c0_i32, %c0_i32_0 : i32, i32
  }
  func.func @transform_2(%arg0: i32) -> (i32, i32) {
    %c0_i32 = arith.constant 0 : i32
    %c0_i32_0 = arith.constant 0 : i32
    %c0_i32_1 = arith.constant 0 : i32
    return %c0_i32, %c0_i32_0 : i32, i32
  }
  func.func @transform_3(%arg0: i32) -> (i32, i32) {
    %c0_i32 = arith.constant 0 : i32
    %c0_i32_0 = arith.constant 0 : i32
    %c0_i32_1 = arith.constant 0 : i32
    return %c0_i32, %c0_i32_0 : i32, i32
  }
  func.func @transform_4(%arg0: i32) -> (i32, i32, i32) {
    %c0_i32 = arith.constant 0 : i32
    %c0_i32_0 = arith.constant 0 : i32
    %c0_i32_1 = arith.constant 0 : i32
    %c0_i32_2 = arith.constant 0 : i32
    return %c0_i32, %c0_i32_0, %c0_i32_1 : i32, i32, i32
  }
  func.func @transform_5(%arg0: i32) -> (i32, i32) {
    %c0_i32 = arith.constant 0 : i32
    %c0_i32_0 = arith.constant 0 : i32
    %c0_i32_1 = arith.constant 0 : i32
    return %c0_i32, %c0_i32_0 : i32, i32
  }
  func.func @transform_6(%arg0: i32) -> (i32, i32) {
    %c0_i32 = arith.constant 0 : i32
    %c0_i32_0 = arith.constant 0 : i32
    %c0_i32_1 = arith.constant 0 : i32
    return %c0_i32, %c0_i32_0 : i32, i32
  }
  func.func @transform_7(%arg0: i32) -> (i32, i32) {
    %c0_i32 = arith.constant 0 : i32
    %c0_i32_0 = arith.constant 0 : i32
    %c0_i32_1 = arith.constant 0 : i32
    return %c0_i32, %c0_i32_0 : i32, i32
  }
  func.func @transform_8(%arg0: i32) -> (i32, i32) {
    %c0_i32 = arith.constant 0 : i32
    %c0_i32_0 = arith.constant 0 : i32
    return %arg0, %c0_i32 : i32, i32
  }
}

</mosaic_0001>

<llo_original>
// kernel: cnn_forward.1
$region0: #{cnn_forward.1}
  #allocation0 [shape = 'u32[]', space=smem, size = 0x4, offset = 0x4, fixed_abs, tag = 'smem constant byte address 0x4 - core index']
  #allocation1 [shape = 'u32[144,128]{1,0:T(1,128)}', space=vmem, size = 0x12000, scoped, tag = 'internal scratch']
  %s0 = inlined_call_operand.vmem [shape: s32[5,128,1], index: 0, kind: input, shape index: {}]
  %s1 = inlined_call_operand.vmem [shape: f32[128,128], index: 1, kind: input, shape index: {}]
  %s2 = inlined_call_operand.vmem [shape: f32[640,128], index: 2, kind: input, shape index: {}]
  %s3 = inlined_call_operand.vmem [shape: f32[1,128], index: 3, kind: input, shape index: {}]
  %s4 = inlined_call_operand.vmem [shape: f32[1,16,128], index: 4, kind: input, shape index: {}]
  %s5 = inlined_call_operand.vmem [shape: f32[128,128], index: 5, kind: input, shape index: {}]
  %s6 = inlined_call_operand.vmem [shape: f32[1,128], index: 6, kind: input, shape index: {}]
  %s7 = inlined_call_operand.vmem [shape: f32[1,128], index: 7, kind: input, shape index: {}]
  %s8 = inlined_call_operand.vmem [shape: f32[8,128], index: 8, kind: output, shape index: {}]
  %s9 = sld [smem:[#allocation0]]
  $region42: #{cnn_forward.1} parent=0
    _
  %s11 = ssub.s32 1, %s9
  %s12 = scalar_select 0, %s11, %s9
  // Predicated region
  $region2: #{cnn_forward.1} parent=0 // pred_check
    _
  $region3: #{cnn_forward.1} parent=0 // pred_check_branch
    %14 = sbr.rel (0) target = $region5
  $region4: #{cnn_forward.1} parent=0 // pred_region
    _
  $region5: #{cnn_forward.1} parent=0 // pred_fallthru
    _
  // Predicated region
  $region6: #{cnn_forward.1} parent=0 // pred_check
    _
  $region7: #{cnn_forward.1} parent=0 // pred_check_branch
    %16 = sbr.rel (0) target = $region9
  $region8: #{cnn_forward.1} parent=0 // pred_region
    _
  $region9: #{cnn_forward.1} parent=0 // pred_fallthru
    _
  // Predicated region
  $region10: #{cnn_forward.1} parent=0 // pred_check
    _
  $region11: #{cnn_forward.1} parent=0 // pred_check_branch
    %18 = sbr.rel (0) target = $region13
  $region12: #{cnn_forward.1} parent=0 // pred_region
    _
  $region13: #{cnn_forward.1} parent=0 // pred_fallthru
    _
  // Predicated region
  $region14: #{cnn_forward.1} parent=0 // pred_check
    _
  $region15: #{cnn_forward.1} parent=0 // pred_check_branch
    %20 = sbr.rel (0) target = $region17
  $region16: #{cnn_forward.1} parent=0 // pred_region
    _
  $region17: #{cnn_forward.1} parent=0 // pred_fallthru
    _
  // Predicated region
  $region18: #{cnn_forward.1} parent=0 // pred_check
    _
  $region19: #{cnn_forward.1} parent=0 // pred_check_branch
    %22 = sbr.rel (0) target = $region21
  $region20: #{cnn_forward.1} parent=0 // pred_region
    _
  $region21: #{cnn_forward.1} parent=0 // pred_fallthru
    _
  // Predicated region
  $region22: #{cnn_forward.1} parent=0 // pred_check
    _
  $region23: #{cnn_forward.1} parent=0 // pred_check_branch
    %24 = sbr.rel (0) target = $region25
  $region24: #{cnn_forward.1} parent=0 // pred_region
    _
  $region25: #{cnn_forward.1} parent=0 // pred_fallthru
    _
  // Predicated region
  $region26: #{cnn_forward.1} parent=0 // pred_check
    _
  $region27: #{cnn_forward.1} parent=0 // pred_check_branch
    %26 = sbr.rel (0) target = $region29
  $region28: #{cnn_forward.1} parent=0 // pred_region
    _
  $region29: #{cnn_forward.1} parent=0 // pred_fallthru
    _
  // Predicated region
  $region30: #{cnn_forward.1} parent=0 // pred_check
    _
  $region31: #{cnn_forward.1} parent=0 // pred_check_branch
    %28 = sbr.rel (0) target = $region33
  $region32: #{cnn_forward.1} parent=0 // pred_region
    _
  $region33: #{cnn_forward.1} parent=0 // pred_fallthru
    _
  %v29 = vlaneseq
  %v30 = vand.u32 %v29, 127
  %v31 = vld [vmem:[%s1] sm:$0xff]
  %v32 = vld [vmem:[%s1 + $0x8] sm:$0xff]
  %v33 = vld [vmem:[%s1 + $0x10] sm:$0xff]
  %v34 = vld [vmem:[%s1 + $0x18] sm:$0xff]
  %v35 = vld [vmem:[%s1 + $0x20] sm:$0xff]
  %v36 = vld [vmem:[%s1 + $0x28] sm:$0xff]
  %v37 = vld [vmem:[%s1 + $0x30] sm:$0xff]
  %v38 = vld [vmem:[%s1 + $0x38] sm:$0xff]
  %v39 = vld [vmem:[%s1 + $0x40] sm:$0xff]
  %v40 = vld [vmem:[%s1 + $0x48] sm:$0xff]
  %v41 = vld [vmem:[%s1 + $0x50] sm:$0xff]
  %v42 = vld [vmem:[%s1 + $0x58] sm:$0xff]
  %v43 = vld [vmem:[%s1 + $0x60] sm:$0xff]
  %v44 = vld [vmem:[%s1 + $0x68] sm:$0xff]
  %v45 = vld [vmem:[%s1 + $0x70] sm:$0xff]
  %v46 = vld [vmem:[%s1 + $0x78] sm:$0xff]
  %v47 = vld [vmem:[%s0] sm:$0xff]
  %v48 = vld [vmem:[%s0 + $0x8] sm:$0xff]
  %v49 = vld [vmem:[%s0 + $0x10] sm:$0xff]
  %v50 = vld [vmem:[%s0 + $0x18] sm:$0xff]
  %v51 = vld [vmem:[%s0 + $0x20] sm:$0xff]
  %v52 = vld [vmem:[%s0 + $0x28] sm:$0xff]
  %v53 = vld [vmem:[%s0 + $0x30] sm:$0xff]
  %v54 = vld [vmem:[%s0 + $0x38] sm:$0xff]
  %v55 = vld [vmem:[%s0 + $0x40] sm:$0xff]
  %v56 = vld [vmem:[%s0 + $0x48] sm:$0xff]
  %v57 = vld [vmem:[%s0 + $0x50] sm:$0xff]
  %v58 = vld [vmem:[%s0 + $0x58] sm:$0xff]
  %v59 = vld [vmem:[%s0 + $0x60] sm:$0xff]
  %v60 = vld [vmem:[%s0 + $0x68] sm:$0xff]
  %v61 = vld [vmem:[%s0 + $0x70] sm:$0xff]
  %v62 = vld [vmem:[%s0 + $0x78] sm:$0xff]
  %63 = vset.pattern.permute.xlu0 0
  %64 = vperm.xlu0 %63, %v47
  %v65 = vpop.permute.xlu0 %64
  %66 = vset.pattern.permute.xlu0 0
  %67 = vperm.xlu0 %66, %v48
  %v68 = vpop.permute.xlu0 %67
  %69 = vset.pattern.permute.xlu0 0
  %70 = vperm.xlu0 %69, %v49
  %v71 = vpop.permute.xlu0 %70
  %72 = vset.pattern.permute.xlu0 0
  %73 = vperm.xlu0 %72, %v50
  %v74 = vpop.permute.xlu0 %73
  %75 = vset.pattern.permute.xlu0 0
  %76 = vperm.xlu0 %75, %v51
  %v77 = vpop.permute.xlu0 %76
  %78 = vset.pattern.permute.xlu0 0
  %79 = vperm.xlu0 %78, %v52
  %v80 = vpop.permute.xlu0 %79
  %81 = vset.pattern.permute.xlu0 0
  %82 = vperm.xlu0 %81, %v53
  %v83 = vpop.permute.xlu0 %82
  %84 = vset.pattern.permute.xlu0 0
  %85 = vperm.xlu0 %84, %v54
  %v86 = vpop.permute.xlu0 %85
  %87 = vset.pattern.permute.xlu0 0
  %88 = vperm.xlu0 %87, %v55
  %v89 = vpop.permute.xlu0 %88
  %90 = vset.pattern.permute.xlu0 0
  %91 = vperm.xlu0 %90, %v56
  %v92 = vpop.permute.xlu0 %91
  %93 = vset.pattern.permute.xlu0 0
  %94 = vperm.xlu0 %93, %v57
  %v95 = vpop.permute.xlu0 %94
  %96 = vset.pattern.permute.xlu0 0
  %97 = vperm.xlu0 %96, %v58
  %v98 = vpop.permute.xlu0 %97
  %99 = vset.pattern.permute.xlu0 0
  %100 = vperm.xlu0 %99, %v59
  %v101 = vpop.permute.xlu0 %100
  %102 = vset.pattern.permute.xlu0 0
  %103 = vperm.xlu0 %102, %v60
  %v104 = vpop.permute.xlu0 %103
  %105 = vset.pattern.permute.xlu0 0
  %106 = vperm.xlu0 %105, %v61
  %v107 = vpop.permute.xlu0 %106
  %108 = vset.pattern.permute.xlu0 0
  %109 = vperm.xlu0 %108, %v62
  %v110 = vpop.permute.xlu0 %109
  %vm111 = vcmp.eq.s32.totalorder %v65, %v30
  %vm112 = vcmp.eq.s32.totalorder %v68, %v30
  %vm113 = vcmp.eq.s32.totalorder %v71, %v30
  %vm114 = vcmp.eq.s32.totalorder %v74, %v30
  %vm115 = vcmp.eq.s32.totalorder %v77, %v30
  %vm116 = vcmp.eq.s32.totalorder %v80, %v30
  %vm117 = vcmp.eq.s32.totalorder %v83, %v30
  %vm118 = vcmp.eq.s32.totalorder %v86, %v30
  %vm119 = vcmp.eq.s32.totalorder %v89, %v30
  %vm120 = vcmp.eq.s32.totalorder %v92, %v30
  %vm121 = vcmp.eq.s32.totalorder %v95, %v30
  %vm122 = vcmp.eq.s32.totalorder %v98, %v30
  %vm123 = vcmp.eq.s32.totalorder %v101, %v30
  %vm124 = vcmp.eq.s32.totalorder %v104, %v30
  %vm125 = vcmp.eq.s32.totalorder %v107, %v30
  %vm126 = vcmp.eq.s32.totalorder %v110, %v30
  %v127 = vsel %vm111, 1, 0
  %v128 = vsel %vm112, 1, 0
  %v129 = vsel %vm113, 1, 0
  %v130 = vsel %vm114, 1, 0
  %v131 = vsel %vm115, 1, 0
  %v132 = vsel %vm116, 1, 0
  %v133 = vsel %vm117, 1, 0
  %v134 = vsel %vm118, 1, 0
  %v135 = vsel %vm119, 1, 0
  %v136 = vsel %vm120, 1, 0
  %v137 = vsel %vm121, 1, 0
  %v138 = vsel %vm122, 1, 0
  %v139 = vsel %vm123, 1, 0
  %v140 = vsel %vm124, 1, 0
  %v141 = vsel %vm125, 1, 0
  %v142 = vsel %vm126, 1, 0
  %v143 = vcvt.s32.f32 %v127
  %v144 = vcvt.s32.f32 %v128
  %v145 = vcvt.s32.f32 %v129
  %v146 = vcvt.s32.f32 %v130
  %v147 = vcvt.s32.f32 %v131
  %v148 = vcvt.s32.f32 %v132
  %v149 = vcvt.s32.f32 %v133
  %v150 = vcvt.s32.f32 %v134
  %v151 = vcvt.s32.f32 %v135
  %v152 = vcvt.s32.f32 %v136
  %v153 = vcvt.s32.f32 %v137
  %v154 = vcvt.s32.f32 %v138
  %v155 = vcvt.s32.f32 %v139
  %v156 = vcvt.s32.f32 %v140
  %v157 = vcvt.s32.f32 %v141
  %v158 = vcvt.s32.f32 %v142
  %159 = vmatprep.subr.mxu0 0.0
  %160 = vmatpush1.msra.mxu0 %v31
  %161 = vmatprep.subr.mxu0 0.0
  %162 = vmatpush1.msra.mxu0 %v32
  %163 = vmatprep.subr.mxu0 0.0
  %164 = vmatpush1.msra.mxu0 %v33
  %165 = vmatprep.subr.mxu0 0.0
  %166 = vmatpush1.msra.mxu0 %v34
  %167 = vmatprep.subr.mxu0 0.0
  %168 = vmatpush1.msra.mxu0 %v35
  %169 = vmatprep.subr.mxu0 0.0
  %170 = vmatpush1.msra.mxu0 %v36
  %171 = vmatprep.subr.mxu0 0.0
  %172 = vmatpush1.msra.mxu0 %v37
  %173 = vmatprep.subr.mxu0 0.0
  %174 = vmatpush1.msra.mxu0 %v38
  %175 = vmatprep.subr.mxu0 0.0
  %176 = vmatpush1.msra.mxu0 %v39
  %177 = vmatprep.subr.mxu0 0.0
  %178 = vmatpush1.msra.mxu0 %v40
  %179 = vmatprep.subr.mxu0 0.0
  %180 = vmatpush1.msra.mxu0 %v41
  %181 = vmatprep.subr.mxu0 0.0
  %182 = vmatpush1.msra.mxu0 %v42
  %183 = vmatprep.subr.mxu0 0.0
  %184 = vmatpush1.msra.mxu0 %v43
  %185 = vmatprep.subr.mxu0 0.0
  %186 = vmatpush1.msra.mxu0 %v44
  %187 = vmatprep.subr.mxu0 0.0
  %188 = vmatpush1.msra.mxu0 %v45
  %189 = vmatprep.subr.mxu0 0.0
  %190 = vmatpush1.msra.mxu0 %v46
  %191 = vmatprep.subr.mxu0 0.0
  %192 = vmatpush1.msra.mxu0 0.0
  %193 = vmatprep.subr.mxu0 0.0
  %194 = vmatpush1.msra.mxu0 0.0
  %195 = vmatprep.subr.mxu0 0.0
  %196 = vmatpush1.msra.mxu0 0.0
  %197 = vmatprep.subr.mxu0 0.0
  %198 = vmatpush1.msra.mxu0 0.0
  %199 = vmatprep.subr.mxu0 0.0
  %200 = vmatpush1.msra.mxu0 0.0
  %201 = vmatprep.subr.mxu0 0.0
  %202 = vmatpush1.msra.mxu0 0.0
  %203 = vmatprep.subr.mxu0 0.0
  %204 = vmatpush1.msra.mxu0 0.0
  %205 = vmatprep.subr.mxu0 0.0
  %206 = vmatpush1.msra.mxu0 0.0
  %207 = vmatprep.subr.mxu0 0.0
  %208 = vmatpush1.msra.mxu0 0.0
  %209 = vmatprep.subr.mxu0 0.0
  %210 = vmatpush1.msra.mxu0 0.0
  %211 = vmatprep.subr.mxu0 0.0
  %212 = vmatpush1.msra.mxu0 0.0
  %213 = vmatprep.subr.mxu0 0.0
  %214 = vmatpush1.msra.mxu0 0.0
  %215 = vmatprep.subr.mxu0 0.0
  %216 = vmatpush1.msra.mxu0 0.0
  %217 = vmatprep.subr.mxu0 0.0
  %218 = vmatpush1.msra.mxu0 0.0
  %219 = vmatprep.subr.mxu0 0.0
  %220 = vmatpush1.msra.mxu0 0.0
  %221 = vmatprep.subr.mxu0 0.0
  %222 = vmatpush1.msra.mxu0 0.0
  %223 = vmatprep.mubr.f32.mxu0 0.0
  %224 = vmatmul.mubr.f32.gmra.mrb[0].mxu0 %v143
  %v225 = vpop.f32.mrb[0].mxu0
  %v226 = vadd.f32 0.0, %v225
  %v227 = vpop.f32.mrb[0].mxu0
  %228 = vmatprep.mubr.f32.mxu0 0.0
  %229 = vmatmul.mubr.f32.gmra.mrb[0].mxu0 %v144
  %v230 = vpop.f32.mrb[0].mxu0
  %v231 = vadd.f32 0.0, %v230
  %v232 = vpop.f32.mrb[0].mxu0
  %233 = vmatprep.mubr.f32.mxu0 0.0
  %234 = vmatmul.mubr.f32.gmra.mrb[0].mxu0 %v145
  %v235 = vpop.f32.mrb[0].mxu0
  %v236 = vadd.f32 0.0, %v235
  %v237 = vpop.f32.mrb[0].mxu0
  %238 = vmatprep.mubr.f32.mxu0 0.0
  %239 = vmatmul.mubr.f32.gmra.mrb[0].mxu0 %v146
  %v240 = vpop.f32.mrb[0].mxu0
  %v241 = vadd.f32 0.0, %v240
  %v242 = vpop.f32.mrb[0].mxu0
  %243 = vmatprep.mubr.f32.mxu0 0.0
  %244 = vmatmul.mubr.f32.gmra.mrb[0].mxu0 %v147
  %v245 = vpop.f32.mrb[0].mxu0
  %v246 = vadd.f32 0.0, %v245
  %v247 = vpop.f32.mrb[0].mxu0
  %248 = vmatprep.mubr.f32.mxu0 0.0
  %249 = vmatmul.mubr.f32.gmra.mrb[0].mxu0 %v148
  %v250 = vpop.f32.mrb[0].mxu0
  %v251 = vadd.f32 0.0, %v250
  %v252 = vpop.f32.mrb[0].mxu0
  %253 = vmatprep.mubr.f32.mxu0 0.0
  %254 = vmatmul.mubr.f32.gmra.mrb[0].mxu0 %v149
  %v255 = vpop.f32.mrb[0].mxu0
  %v256 = vadd.f32 0.0, %v255
  %v257 = vpop.f32.mrb[0].mxu0
  %258 = vmatprep.mubr.f32.mxu0 0.0
  %259 = vmatmul.mubr.f32.gmra.mrb[0].mxu0 %v150
  %v260 = vpop.f32.mrb[0].mxu0
  %v261 = vadd.f32 0.0, %v260
  %v262 = vpop.f32.mrb[0].mxu0
  %263 = vmatprep.mubr.f32.mxu0 0.0
  %264 = vmatmul.mubr.f32.gmra.mrb[0].mxu0 %v151
  %v265 = vpop.f32.mrb[0].mxu0
  %v266 = vadd.f32 0.0, %v265
  %v267 = vpop.f32.mrb[0].mxu0
  %268 = vmatprep.mubr.f32.mxu0 0.0
  %269 = vmatmul.mubr.f32.gmra.mrb[0].mxu0 %v152
  %v270 = vpop.f32.mrb[0].mxu0
  %v271 = vadd.f32 0.0, %v270
  %v272 = vpop.f32.mrb[0].mxu0
  %273 = vmatprep.mubr.f32.mxu0 0.0
  %274 = vmatmul.mubr.f32.gmra.mrb[0].mxu0 %v153
  %v275 = vpop.f32.mrb[0].mxu0
  %v276 = vadd.f32 0.0, %v275
  %v277 = vpop.f32.mrb[0].mxu0
  %278 = vmatprep.mubr.f32.mxu0 0.0
  %279 = vmatmul.mubr.f32.gmra.mrb[0].mxu0 %v154
  %v280 = vpop.f32.mrb[0].mxu0
  %v281 = vadd.f32 0.0, %v280
  %v282 = vpop.f32.mrb[0].mxu0
  %283 = vmatprep.mubr.f32.mxu0 0.0
  %284 = vmatmul.mubr.f32.gmra.mrb[0].mxu0 %v155
  %v285 = vpop.f32.mrb[0].mxu0
  %v286 = vadd.f32 0.0, %v285
  %v287 = vpop.f32.mrb[0].mxu0
  %288 = vmatprep.mubr.f32.mxu0 0.0
  %289 = vmatmul.mubr.f32.gmra.mrb[0].mxu0 %v156
  %v290 = vpop.f32.mrb[0].mxu0
  %v291 = vadd.f32 0.0, %v290
  %v292 = vpop.f32.mrb[0].mxu0
  %293 = vmatprep.mubr.f32.mxu0 0.0
  %294 = vmatmul.mubr.f32.gmra.mrb[0].mxu0 %v157
  %v295 = vpop.f32.mrb[0].mxu0
  %v296 = vadd.f32 0.0, %v295
  %v297 = vpop.f32.mrb[0].mxu0
  %298 = vmatprep.mubr.f32.mxu0 0.0
  %299 = vmatmul.mubr.f32.gmra.mrb[0].mxu0 %v158
  %v300 = vpop.f32.mrb[0].mxu0
  %v301 = vadd.f32 0.0, %v300
  %v302 = vpop.f32.mrb[0].mxu0
  %303 = vdwg.mxu0
  %v304 = vld [vmem:[%s2] sm:$0xff]
  %v305 = vld [vmem:[%s2 + $0x8] sm:$0xff]
  %v306 = vld [vmem:[%s2 + $0x10] sm:$0xff]
  %v307 = vld [vmem:[%s2 + $0x18] sm:$0xff]
  %v308 = vld [vmem:[%s2 + $0x20] sm:$0xff]
  %v309 = vld [vmem:[%s2 + $0x28] sm:$0xff]
  %v310 = vld [vmem:[%s2 + $0x30] sm:$0xff]
  %v311 = vld [vmem:[%s2 + $0x38] sm:$0xff]
  %v312 = vld [vmem:[%s2 + $0x40] sm:$0xff]
  %v313 = vld [vmem:[%s2 + $0x48] sm:$0xff]
  %v314 = vld [vmem:[%s2 + $0x50] sm:$0xff]
  %v315 = vld [vmem:[%s2 + $0x58] sm:$0xff]
  %v316 = vld [vmem:[%s2 + $0x60] sm:$0xff]
  %v317 = vld [vmem:[%s2 + $0x68] sm:$0xff]
  %v318 = vld [vmem:[%s2 + $0x70] sm:$0xff]
  %v319 = vld [vmem:[%s2 + $0x78] sm:$0xff]
  %s320 = scalar_lea.vmem %s0, 128
  %v321 = vld [vmem:[%s320] sm:$0xff]
  %v322 = vld [vmem:[%s320 + $0x8] sm:$0xff]
  %v323 = vld [vmem:[%s320 + $0x10] sm:$0xff]
  %v324 = vld [vmem:[%s320 + $0x18] sm:$0xff]
  %v325 = vld [vmem:[%s320 + $0x20] sm:$0xff]
  %v326 = vld [vmem:[%s320 + $0x28] sm:$0xff]
  %v327 = vld [vmem:[%s320 + $0x30] sm:$0xff]
  %v328 = vld [vmem:[%s320 + $0x38] sm:$0xff]
  %v329 = vld [vmem:[%s320 + $0x40] sm:$0xff]
  %v330 = vld [vmem:[%s320 + $0x48] sm:$0xff]
  %v331 = vld [vmem:[%s320 + $0x50] sm:$0xff]
  %v332 = vld [vmem:[%s320 + $0x58] sm:$0xff]
  %v333 = vld [vmem:[%s320 + $0x60] sm:$0xff]
  %v334 = vld [vmem:[%s320 + $0x68] sm:$0xff]
  %v335 = vld [vmem:[%s320 + $0x70] sm:$0xff]
  %v336 = vld [vmem:[%s320 + $0x78] sm:$0xff]
  %337 = vset.pattern.permute.xlu0 0
  %338 = vperm.xlu0 %337, %v321
  %v339 = vpop.permute.xlu0 %338
  %340 = vset.pattern.permute.xlu0 0
  %341 = vperm.xlu0 %340, %v322
  %v342 = vpop.permute.xlu0 %341
  %343 = vset.pattern.permute.xlu0 0
  %344 = vperm.xlu0 %343, %v323
  %v345 = vpop.permute.xlu0 %344
  %346 = vset.pattern.permute.xlu0 0
  %347 = vperm.xlu0 %346, %v324
  %v348 = vpop.permute.xlu0 %347
  %349 = vset.pattern.permute.xlu0 0
  %350 = vperm.xlu0 %349, %v325
  %v351 = vpop.permute.xlu0 %350
  %352 = vset.pattern.permute.xlu0 0
  %353 = vperm.xlu0 %352, %v326
  %v354 = vpop.permute.xlu0 %353
  %355 = vset.pattern.permute.xlu0 0
  %356 = vperm.xlu0 %355, %v327
  %v357 = vpop.permute.xlu0 %356
  %358 = vset.pattern.permute.xlu0 0
  %359 = vperm.xlu0 %358, %v328
  %v360 = vpop.permute.xlu0 %359
  %361 = vset.pattern.permute.xlu0 0
  %362 = vperm.xlu0 %361, %v329
  %v363 = vpop.permute.xlu0 %362
  %364 = vset.pattern.permute.xlu0 0
  %365 = vperm.xlu0 %364, %v330
  %v366 = vpop.permute.xlu0 %365
  %367 = vset.pattern.permute.xlu0 0
  %368 = vperm.xlu0 %367, %v331
  %v369 = vpop.permute.xlu0 %368
  %370 = vset.pattern.permute.xlu0 0
  %371 = vperm.xlu0 %370, %v332
  %v372 = vpop.permute.xlu0 %371
  %373 = vset.pattern.permute.xlu0 0
  %374 = vperm.xlu0 %373, %v333
  %v375 = vpop.permute.xlu0 %374
  %376 = vset.pattern.permute.xlu0 0
  %377 = vperm.xlu0 %376, %v334
  %v378 = vpop.permute.xlu0 %377
  %379 = vset.pattern.permute.xlu0 0
  %380 = vperm.xlu0 %379, %v335
  %v381 = vpop.permute.xlu0 %380
  %382 = vset.pattern.permute.xlu0 0
  %383 = vperm.xlu0 %382, %v336
  %v384 = vpop.permute.xlu0 %383
  %vm385 = vcmp.eq.s32.totalorder %v339, %v30
  %vm386 = vcmp.eq.s32.totalorder %v342, %v30
  %vm387 = vcmp.eq.s32.totalorder %v345, %v30
  %vm388 = vcmp.eq.s32.totalorder %v348, %v30
  %vm389 = vcmp.eq.s32.totalorder %v351, %v30
  %vm390 = vcmp.eq.s32.totalorder %v354, %v30
  %vm391 = vcmp.eq.s32.totalorder %v357, %v30
  %vm392 = vcmp.eq.s32.totalorder %v360, %v30
  %vm393 = vcmp.eq.s32.totalorder %v363, %v30
  %vm394 = vcmp.eq.s32.totalorder %v366, %v30
  %vm395 = vcmp.eq.s32.totalorder %v369, %v30
  %vm396 = vcmp.eq.s32.totalorder %v372, %v30
  %vm397 = vcmp.eq.s32.totalorder %v375, %v30
  %vm398 = vcmp.eq.s32.totalorder %v378, %v30
  %vm399 = vcmp.eq.s32.totalorder %v381, %v30
  %vm400 = vcmp.eq.s32.totalorder %v384, %v30
  %v401 = vsel %vm385, 1, 0
  %v402 = vsel %vm386, 1, 0
  %v403 = vsel %vm387, 1, 0
  %v404 = vsel %vm388, 1, 0
  %v405 = vsel %vm389, 1, 0
  %v406 = vsel %vm390, 1, 0
  %v407 = vsel %vm391, 1, 0
  %v408 = vsel %vm392, 1, 0
  %v409 = vsel %vm393, 1, 0
  %v410 = vsel %vm394, 1, 0
  %v411 = vsel %vm395, 1, 0
  %v412 = vsel %vm396, 1, 0
  %v413 = vsel %vm397, 1, 0
  %v414 = vsel %vm398, 1, 0
  %v415 = vsel %vm399, 1, 0
  %v416 = vsel %vm400, 1, 0
  %v417 = vcvt.s32.f32 %v401
  %v418 = vcvt.s32.f32 %v402
  %v419 = vcvt.s32.f32 %v403
  %v420 = vcvt.s32.f32 %v404
  %v421 = vcvt.s32.f32 %v405
  %v422 = vcvt.s32.f32 %v406
  %v423 = vcvt.s32.f32 %v407
  %v424 = vcvt.s32.f32 %v408
  %v425 = vcvt.s32.f32 %v409
  %v426 = vcvt.s32.f32 %v410
  %v427 = vcvt.s32.f32 %v411
  %v428 = vcvt.s32.f32 %v412
  %v429 = vcvt.s32.f32 %v413
  %v430 = vcvt.s32.f32 %v414
  %v431 = vcvt.s32.f32 %v415
  %v432 = vcvt.s32.f32 %v416
  %433 = vmatprep.subr.mxu0 0.0
  %434 = vmatpush1.msra.mxu0 %v31
  %435 = vmatprep.subr.mxu0 0.0
  %436 = vmatpush1.msra.mxu0 %v32
  %437 = vmatprep.subr.mxu0 0.0
  %438 = vmatpush1.msra.mxu0 %v33
  %439 = vmatprep.subr.mxu0 0.0
  %440 = vmatpush1.msra.mxu0 %v34
  %441 = vmatprep.subr.mxu0 0.0
  %442 = vmatpush1.msra.mxu0 %v35
  %443 = vmatprep.subr.mxu0 0.0
  %444 = vmatpush1.msra.mxu0 %v36
  %445 = vmatprep.subr.mxu0 0.0
  %446 = vmatpush1.msra.mxu0 %v37
  %447 = vmatprep.subr.mxu0 0.0
  %448 = vmatpush1.msra.mxu0 %v38
  %449 = vmatprep.subr.mxu0 0.0
  %450 = vmatpush1.msra.mxu0 %v39
  %451 = vmatprep.subr.mxu0 0.0
  %452 = vmatpush1.msra.mxu0 %v40
  %453 = vmatprep.subr.mxu0 0.0
  %454 = vmatpush1.msra.mxu0 %v41
  %455 = vmatprep.subr.mxu0 0.0
  %456 = vmatpush1.msra.mxu0 %v42
  %457 = vmatprep.subr.mxu0 0.0
  %458 = vmatpush1.msra.mxu0 %v43
  %459 = vmatprep.subr.mxu0 0.0
  %460 = vmatpush1.msra.mxu0 %v44
  %461 = vmatprep.subr.mxu0 0.0
  %462 = vmatpush1.msra.mxu0 %v45
  %463 = vmatprep.subr.mxu0 0.0
  %464 = vmatpush1.msra.mxu0 %v46
  %465 = vmatprep.subr.mxu0 0.0
  %466 = vmatpush1.msra.mxu0 0.0
  %467 = vmatprep.subr.mxu0 0.0
  %468 = vmatpush1.msra.mxu0 0.0
  %469 = vmatprep.subr.mxu0 0.0
  %470 = vmatpush1.msra.mxu0 0.0
  %471 = vmatprep.subr.mxu0 0.0
  %472 = vmatpush1.msra.mxu0 0.0
  %473 = vmatprep.subr.mxu0 0.0
  %474 = vmatpush1.msra.mxu0 0.0
  %475 = vmatprep.subr.mxu0 0.0
  %476 = vmatpush1.msra.mxu0 0.0
  %477 = vmatprep.subr.mxu0 0.0
  %478 = vmatpush1.msra.mxu0 0.0
  %479 = vmatprep.subr.mxu0 0.0
  %480 = vmatpush1.msra.mxu0 0.0
  %481 = vmatprep.subr.mxu0 0.0
  %482 = vmatpush1.msra.mxu0 0.0
  %483 = vmatprep.subr.mxu0 0.0
  %484 = vmatpush1.msra.mxu0 0.0
  %485 = vmatprep.subr.mxu0 0.0
  %486 = vmatpush1.msra.mxu0 0.0
  %487 = vmatprep.subr.mxu0 0.0
  %488 = vmatpush1.msra.mxu0 0.0
  %489 = vmatprep.subr.mxu0 0.0
  %490 = vmatpush1.msra.mxu0 0.0
  %491 = vmatprep.subr.mxu0 0.0
  %492 = vmatpush1.msra.mxu0 0.0
  %493 = vmatprep.subr.mxu0 0.0
  %494 = vmatpush1.msra.mxu0 0.0
  %495 = vmatprep.subr.mxu0 0.0
  %496 = vmatpush1.msra.mxu0 0.0
  %497 = vmatprep.mubr.f32.mxu0 0.0
  %498 = vmatmul.mubr.f32.gmra.mrb[0].mxu0 %v417
  %v499 = vpop.f32.mrb[0].mxu0
  %v500 = vadd.f32 0.0, %v499
  %v501 = vpop.f32.mrb[0].mxu0
  %502 = vmatprep.mubr.f32.mxu0 0.0
  %503 = vmatmul.mubr.f32.gmra.mrb[0].mxu0 %v418
  %v504 = vpop.f32.mrb[0].mxu0
  %v505 = vadd.f32 0.0, %v504
  %v506 = vpop.f32.mrb[0].mxu0
  %507 = vmatprep.mubr.f32.mxu0 0.0
  %508 = vmatmul.mubr.f32.gmra.mrb[0].mxu0 %v419
  %v509 = vpop.f32.mrb[0].mxu0
  %v510 = vadd.f32 0.0, %v509
  %v511 = vpop.f32.mrb[0].mxu0
  %512 = vmatprep.mubr.f32.mxu0 0.0
  %513 = vmatmul.mubr.f32.gmra.mrb[0].mxu0 %v420
  %v514 = vpop.f32.mrb[0].mxu0
  %v515 = vadd.f32 0.0, %v514
  %v516 = vpop.f32.mrb[0].mxu0
  %517 = vmatprep.mubr.f32.mxu0 0.0
  %518 = vmatmul.mubr.f32.gmra.mrb[0].mxu0 %v421
  %v519 = vpop.f32.mrb[0].mxu0
  %v520 = vadd.f32 0.0, %v519
  %v521 = vpop.f32.mrb[0].mxu0
  %522 = vmatprep.mubr.f32.mxu0 0.0
  %523 = vmatmul.mubr.f32.gmra.mrb[0].mxu0 %v422
  %v524 = vpop.f32.mrb[0].mxu0
  %v525 = vadd.f32 0.0, %v524
  %v526 = vpop.f32.mrb[0].mxu0
  %527 = vmatprep.mubr.f32.mxu0 0.0
  %528 = vmatmul.mubr.f32.gmra.mrb[0].mxu0 %v423
  %v529 = vpop.f32.mrb[0].mxu0
  %v530 = vadd.f32 0.0, %v529
  %v531 = vpop.f32.mrb[0].mxu0
  %532 = vmatprep.mubr.f32.mxu0 0.0
  %533 = vmatmul.mubr.f32.gmra.mrb[0].mxu0 %v424
  %v534 = vpop.f32.mrb[0].mxu0
  %v535 = vadd.f32 0.0, %v534
  %v536 = vpop.f32.mrb[0].mxu0
  %537 = vmatprep.mubr.f32.mxu0 0.0
  %538 = vmatmul.mubr.f32.gmra.mrb[0].mxu0 %v425
  %v539 = vpop.f32.mrb[0].mxu0
  %v540 = vadd.f32 0.0, %v539
  %v541 = vpop.f32.mrb[0].mxu0
  %542 = vmatprep.mubr.f32.mxu0 0.0
  %543 = vmatmul.mubr.f32.gmra.mrb[0].mxu0 %v426
  %v544 = vpop.f32.mrb[0].mxu0
  %v545 = vadd.f32 0.0, %v544
  %v546 = vpop.f32.mrb[0].mxu0
  %547 = vmatprep.mubr.f32.mxu0 0.0
  %548 = vmatmul.mubr.f32.gmra.mrb[0].mxu0 %v427
  %v549 = vpop.f32.mrb[0].mxu0
  %v550 = vadd.f32 0.0, %v549
  %v551 = vpop.f32.mrb[0].mxu0
  %552 = vmatprep.mubr.f32.mxu0 0.0
  %553 = vmatmul.mubr.f32.gmra.mrb[0].mxu0 %v428
  %v554 = vpop.f32.mrb[0].mxu0
  %v555 = vadd.f32 0.0, %v554
  %v556 = vpop.f32.mrb[0].mxu0
  %557 = vmatprep.mubr.f32.mxu0 0.0
  %558 = vmatmul.mubr.f32.gmra.mrb[0].mxu0 %v429
  %v559 = vpop.f32.mrb[0].mxu0
  %v560 = vadd.f32 0.0, %v559
  %v561 = vpop.f32.mrb[0].mxu0
  %562 = vmatprep.mubr.f32.mxu0 0.0
  %563 = vmatmul.mubr.f32.gmra.mrb[0].mxu0 %v430
  %v564 = vpop.f32.mrb[0].mxu0
  %v565 = vadd.f32 0.0, %v564
  %v566 = vpop.f32.mrb[0].mxu0
  %567 = vmatprep.mubr.f32.mxu0 0.0
  %568 = vmatmul.mubr.f32.gmra.mrb[0].mxu0 %v431
  %v569 = vpop.f32.mrb[0].mxu0
  %v570 = vadd.f32 0.0, %v569
  %v571 = vpop.f32.mrb[0].mxu0
  %572 = vmatprep.mubr.f32.mxu0 0.0
  %573 = vmatmul.mubr.f32.gmra.mrb[0].mxu0 %v432
  %v574 = vpop.f32.mrb[0].mxu0
  %v575 = vadd.f32 0.0, %v574
  %v576 = vpop.f32.mrb[0].mxu0
  %577 = vdwg.mxu0
  %v578 = vld [vmem:[%s2 + $0x80] sm:$0xff]
  %v579 = vld [vmem:[%s2 + $0x88] sm:$0xff]
  %v580 = vld [vmem:[%s2 + $0x90] sm:$0xff]
  %v581 = vld [vmem:[%s2 + $0x98] sm:$0xff]
  %v582 = vld [vmem:[%s2 + $0xa0] sm:$0xff]
  %v583 = vld [vmem:[%s2 + $0xa8] sm:$0xff]
  %v584 = vld [vmem:[%s2 + $0xb0] sm:$0xff]
  %v585 = vld [vmem:[%s2 + $0xb8] sm:$0xff]
  %v586 = vld [vmem:[%s2 + $0xc0] sm:$0xff]
  %v587 = vld [vmem:[%s2 + $0xc8] sm:$0xff]
  %v588 = vld [vmem:[%s2 + $0xd0] sm:$0xff]
  %v589 = vld [vmem:[%s2 + $0xd8] sm:$0xff]
  %v590 = vld [vmem:[%s2 + $0xe0] sm:$0xff]
  %v591 = vld [vmem:[%s2 + $0xe8] sm:$0xff]
  %v592 = vld [vmem:[%s2 + $0xf0] sm:$0xff]
  %v593 = vld [vmem:[%s2 + $0xf8] sm:$0xff]
  %594 = vmatprep.subr.mxu0 0.0
  %595 = vmatpush1.msra.mxu0 %v578
  %596 = vmatprep.subr.mxu0 0.0
  %597 = vmatpush1.msra.mxu0 %v579
  %598 = vmatprep.subr.mxu0 0.0
  %599 = vmatpush1.msra.mxu0 %v580
  %600 = vmatprep.subr.mxu0 0.0
  %601 = vmatpush1.msra.mxu0 %v581
  %602 = vmatprep.subr.mxu0 0.0
  %603 = vmatpush1.msra.mxu0 %v582
  %604 = vmatprep.subr.mxu0 0.0
  %605 = vmatpush1.msra.mxu0 %v583
  %606 = vmatprep.subr.mxu0 0.0
  %607 = vmatpush1.msra.mxu0 %v584
  %608 = vmatprep.subr.mxu0 0.0
  %609 = vmatpush1.msra.mxu0 %v585
  %610 = vmatprep.subr.mxu0 0.0
  %611 = vmatpush1.msra.mxu0 %v586
  %612 = vmatprep.subr.mxu0 0.0
  %613 = vmatpush1.msra.mxu0 %v587
  %614 = vmatprep.subr.mxu0 0.0
  %615 = vmatpush1.msra.mxu0 %v588
  %616 = vmatprep.subr.mxu0 0.0
  %617 = vmatpush1.msra.mxu0 %v589
  %618 = vmatprep.subr.mxu0 0.0
  %619 = vmatpush1.msra.mxu0 %v590
  %620 = vmatprep.subr.mxu0 0.0
  %621 = vmatpush1.msra.mxu0 %v591
  %622 = vmatprep.subr.mxu0 0.0
  %623 = vmatpush1.msra.mxu0 %v592
  %624 = vmatprep.subr.mxu0 0.0
  %625 = vmatpush1.msra.mxu0 %v593
  %626 = vmatprep.subr.mxu0 0.0
  %627 = vmatpush1.msra.mxu0 0.0
  %628 = vmatprep.subr.mxu0 0.0
  %629 = vmatpush1.msra.mxu0 0.0
  %630 = vmatprep.subr.mxu0 0.0
  %631 = vmatpush1.msra.mxu0 0.0
  %632 = vmatprep.subr.mxu0 0.0
  %633 = vmatpush1.msra.mxu0 0.0
  %634 = vmatprep.subr.mxu0 0.0
  %635 = vmatpush1.msra.mxu0 0.0
  %636 = vmatprep.subr.mxu0 0.0
  %637 = vmatpush1.msra.mxu0 0.0
  %638 = vmatprep.subr.mxu0 0.0
  %639 = vmatpush1.msra.mxu0 0.0
  %640 = vmatprep.subr.mxu0 0.0
  %641 = vmatpush1.msra.mxu0 0.0
  %642 = vmatprep.subr.mxu0 0.0
  %643 = vmatpush1.msra.mxu0 0.0
  %644 = vmatprep.subr.mxu0 0.0
  %645 = vmatpush1.msra.mxu0 0.0
  %646 = vmatprep.subr.mxu0 0.0
  %647 = vmatpush1.msra.mxu0 0.0
  %648 = vmatprep.subr.mxu0 0.0
  %649 = vmatpush1.msra.mxu0 0.0
  %650 = vmatprep.subr.mxu0 0.0
  %651 = vmatpush1.msra.mxu0 0.0
  %652 = vmatprep.subr.mxu0 0.0
  %653 = vmatpush1.msra.mxu0 0.0
  %654 = vmatprep.subr.mxu0 0.0
  %655 = vmatpush1.msra.mxu0 0.0
  %656 = vmatprep.subr.mxu0 0.0
  %657 = vmatpush1.msra.mxu0 0.0
  %658 = vmatprep.mubr.f32.mxu0 0.0
  %659 = vmatmul.mubr.f32.gmra.mrb[0].mxu0 %v500
  %v660 = vpop.f32.mrb[0].mxu0
  %v661 = vadd.f32 0.0, %v660
  %v662 = vpop.f32.mrb[0].mxu0
  %663 = vmatprep.mubr.f32.mxu0 0.0
  %664 = vmatmul.mubr.f32.gmra.mrb[0].mxu0 %v505
  %v665 = vpop.f32.mrb[0].mxu0
  %v666 = vadd.f32 0.0, %v665
  %v667 = vpop.f32.mrb[0].mxu0
  %668 = vmatprep.mubr.f32.mxu0 0.0
  %669 = vmatmul.mubr.f32.gmra.mrb[0].mxu0 %v510
  %v670 = vpop.f32.mrb[0].mxu0
  %v671 = vadd.f32 0.0, %v670
  %v672 = vpop.f32.mrb[0].mxu0
  %673 = vmatprep.mubr.f32.mxu0 0.0
  %674 = vmatmul.mubr.f32.gmra.mrb[0].mxu0 %v515
  %v675 = vpop.f32.mrb[0].mxu0
  %v676 = vadd.f32 0.0, %v675
  %v677 = vpop.f32.mrb[0].mxu0
  %678 = vmatprep.mubr.f32.mxu0 0.0
  %679 = vmatmul.mubr.f32.gmra.mrb[0].mxu0 %v520
  %v680 = vpop.f32.mrb[0].mxu0
  %v681 = vadd.f32 0.0, %v680
  %v682 = vpop.f32.mrb[0].mxu0
  %683 = vmatprep.mubr.f32.mxu0 0.0
  %684 = vmatmul.mubr.f32.gmra.mrb[0].mxu0 %v525
  %v685 = vpop.f32.mrb[0].mxu0
  %v686 = vadd.f32 0.0, %v685
  %v687 = vpop.f32.mrb[0].mxu0
  %688 = vmatprep.mubr.f32.mxu0 0.0
  %689 = vmatmul.mubr.f32.gmra.mrb[0].mxu0 %v530
  %v690 = vpop.f32.mrb[0].mxu0
  %v691 = vadd.f32 0.0, %v690
  %v692 = vpop.f32.mrb[0].mxu0
  %693 = vmatprep.mubr.f32.mxu0 0.0
  %694 = vmatmul.mubr.f32.gmra.mrb[0].mxu0 %v535
  %v695 = vpop.f32.mrb[0].mxu0
  %v696 = vadd.f32 0.0, %v695
  %v697 = vpop.f32.mrb[0].mxu0
  %698 = vmatprep.mubr.f32.mxu0 0.0
  %699 = vmatmul.mubr.f32.gmra.mrb[0].mxu0 %v540
  %v700 = vpop.f32.mrb[0].mxu0
  %v701 = vadd.f32 0.0, %v700
  %v702 = vpop.f32.mrb[0].mxu0
  %703 = vmatprep.mubr.f32.mxu0 0.0
  %704 = vmatmul.mubr.f32.gmra.mrb[0].mxu0 %v545
  %v705 = vpop.f32.mrb[0].mxu0
  %v706 = vadd.f32 0.0, %v705
  %v707 = vpop.f32.mrb[0].mxu0
  %708 = vmatprep.mubr.f32.mxu0 0.0
  %709 = vmatmul.mubr.f32.gmra.mrb[0].mxu0 %v550
  %v710 = vpop.f32.mrb[0].mxu0
  %v711 = vadd.f32 0.0, %v710
  %v712 = vpop.f32.mrb[0].mxu0
  %713 = vmatprep.mubr.f32.mxu0 0.0
  %714 = vmatmul.mubr.f32.gmra.mrb[0].mxu0 %v555
  %v715 = vpop.f32.mrb[0].mxu0
  %v716 = vadd.f32 0.0, %v715
  %v717 = vpop.f32.mrb[0].mxu0
  %718 = vmatprep.mubr.f32.mxu0 0.0
  %719 = vmatmul.mubr.f32.gmra.mrb[0].mxu0 %v560
  %v720 = vpop.f32.mrb[0].mxu0
  %v721 = vadd.f32 0.0, %v720
  %v722 = vpop.f32.mrb[0].mxu0
  %723 = vmatprep.mubr.f32.mxu0 0.0
  %724 = vmatmul.mubr.f32.gmra.mrb[0].mxu0 %v565
  %v725 = vpop.f32.mrb[0].mxu0
  %v726 = vadd.f32 0.0, %v725
  %v727 = vpop.f32.mrb[0].mxu0
  %728 = vmatprep.mubr.f32.mxu0 0.0
  %729 = vmatmul.mubr.f32.gmra.mrb[0].mxu0 %v570
  %v730 = vpop.f32.mrb[0].mxu0
  %v731 = vadd.f32 0.0, %v730
  %v732 = vpop.f32.mrb[0].mxu0
  %733 = vmatprep.mubr.f32.mxu0 0.0
  %734 = vmatmul.mubr.f32.gmra.mrb[0].mxu0 %v575
  %v735 = vpop.f32.mrb[0].mxu0
  %v736 = vadd.f32 0.0, %v735
  %v737 = vpop.f32.mrb[0].mxu0
  %738 = vdwg.mxu0
  %739 = vmatprep.subr.mxu0 0.0
  %740 = vmatpush1.msra.mxu0 %v304
  %741 = vmatprep.subr.mxu0 0.0
  %742 = vmatpush1.msra.mxu0 %v305
  %743 = vmatprep.subr.mxu0 0.0
  %744 = vmatpush1.msra.mxu0 %v306
  %745 = vmatprep.subr.mxu0 0.0
  %746 = vmatpush1.msra.mxu0 %v307
  %747 = vmatprep.subr.mxu0 0.0
  %748 = vmatpush1.msra.mxu0 %v308
  %749 = vmatprep.subr.mxu0 0.0
  %750 = vmatpush1.msra.mxu0 %v309
  %751 = vmatprep.subr.mxu0 0.0
  %752 = vmatpush1.msra.mxu0 %v310
  %753 = vmatprep.subr.mxu0 0.0
  %754 = vmatpush1.msra.mxu0 %v311
  %755 = vmatprep.subr.mxu0 0.0
  %756 = vmatpush1.msra.mxu0 %v312
  %757 = vmatprep.subr.mxu0 0.0
  %758 = vmatpush1.msra.mxu0 %v313
  %759 = vmatprep.subr.mxu0 0.0
  %760 = vmatpush1.msra.mxu0 %v314
  %761 = vmatprep.subr.mxu0 0.0
  %762 = vmatpush1.msra.mxu0 %v315
  %763 = vmatprep.subr.mxu0 0.0
  %764 = vmatpush1.msra.mxu0 %v316
  %765 = vmatprep.subr.mxu0 0.0
  %766 = vmatpush1.msra.mxu0 %v317
  %767 = vmatprep.subr.mxu0 0.0
  %768 = vmatpush1.msra.mxu0 %v318
  %769 = vmatprep.subr.mxu0 0.0
  %770 = vmatpush1.msra.mxu0 %v319
  %771 = vmatprep.subr.mxu0 0.0
  %772 = vmatpush1.msra.mxu0 0.0
  %773 = vmatprep.subr.mxu0 0.0
  %774 = vmatpush1.msra.mxu0 0.0
  %775 = vmatprep.subr.mxu0 0.0
  %776 = vmatpush1.msra.mxu0 0.0
  %777 = vmatprep.subr.mxu0 0.0
  %778 = vmatpush1.msra.mxu0 0.0
  %779 = vmatprep.subr.mxu0 0.0
  %780 = vmatpush1.msra.mxu0 0.0
  %781 = vmatprep.subr.mxu0 0.0
  %782 = vmatpush1.msra.mxu0 0.0
  %783 = vmatprep.subr.mxu0 0.0
  %784 = vmatpush1.msra.mxu0 0.0
  %785 = vmatprep.subr.mxu0 0.0
  %786 = vmatpush1.msra.mxu0 0.0
  %787 = vmatprep.subr.mxu0 0.0
  %788 = vmatpush1.msra.mxu0 0.0
  %789 = vmatprep.subr.mxu0 0.0
  %790 = vmatpush1.msra.mxu0 0.0
  %791 = vmatprep.subr.mxu0 0.0
  %792 = vmatpush1.msra.mxu0 0.0
  %793 = vmatprep.subr.mxu0 0.0
  %794 = vmatpush1.msra.mxu0 0.0
  %795 = vmatprep.subr.mxu0 0.0
  %796 = vmatpush1.msra.mxu0 0.0
  %797 = vmatprep.subr.mxu0 0.0
  %798 = vmatpush1.msra.mxu0 0.0
  %799 = vmatprep.subr.mxu0 0.0
  %800 = vmatpush1.msra.mxu0 0.0
  %801 = vmatprep.subr.mxu0 0.0
  %802 = vmatpush1.msra.mxu0 0.0
  %803 = vmatprep.mubr.f32.mxu0 0.0
  %804 = vmatmul.mubr.f32.gmra.mrb[0].mxu0 %v226
  %v805 = vpop.f32.mrb[0].mxu0
  %v806 = vadd.f32 %v661, %v805
  %v807 = vpop.f32.mrb[0].mxu0
  %808 = vmatprep.mubr.f32.mxu0 0.0
  %809 = vmatmul.mubr.f32.gmra.mrb[0].mxu0 %v231
  %v810 = vpop.f32.mrb[0].mxu0
  %v811 = vadd.f32 %v666, %v810
  %v812 = vpop.f32.mrb[0].mxu0
  %813 = vmatprep.mubr.f32.mxu0 0.0
  %814 = vmatmul.mubr.f32.gmra.mrb[0].mxu0 %v236
  %v815 = vpop.f32.mrb[0].mxu0
  %v816 = vadd.f32 %v671, %v815
  %v817 = vpop.f32.mrb[0].mxu0
  %818 = vmatprep.mubr.f32.mxu0 0.0
  %819 = vmatmul.mubr.f32.gmra.mrb[0].mxu0 %v241
  %v820 = vpop.f32.mrb[0].mxu0
  %v821 = vadd.f32 %v676, %v820
  %v822 = vpop.f32.mrb[0].mxu0
  %823 = vmatprep.mubr.f32.mxu0 0.0
  %824 = vmatmul.mubr.f32.gmra.mrb[0].mxu0 %v246
  %v825 = vpop.f32.mrb[0].mxu0
  %v826 = vadd.f32 %v681, %v825
  %v827 = vpop.f32.mrb[0].mxu0
  %828 = vmatprep.mubr.f32.mxu0 0.0
  %829 = vmatmul.mubr.f32.gmra.mrb[0].mxu0 %v251
  %v830 = vpop.f32.mrb[0].mxu0
  %v831 = vadd.f32 %v686, %v830
  %v832 = vpop.f32.mrb[0].mxu0
  %833 = vmatprep.mubr.f32.mxu0 0.0
  %834 = vmatmul.mubr.f32.gmra.mrb[0].mxu0 %v256
  %v835 = vpop.f32.mrb[0].mxu0
  %v836 = vadd.f32 %v691, %v835
  %v837 = vpop.f32.mrb[0].mxu0
  %838 = vmatprep.mubr.f32.mxu0 0.0
  %839 = vmatmul.mubr.f32.gmra.mrb[0].mxu0 %v261
  %v840 = vpop.f32.mrb[0].mxu0
  %v841 = vadd.f32 %v696, %v840
  %v842 = vpop.f32.mrb[0].mxu0
  %843 = vmatprep.mubr.f32.mxu0 0.0
  %844 = vmatmul.mubr.f32.gmra.mrb[0].mxu0 %v266
  %v845 = vpop.f32.mrb[0].mxu0
  %v846 = vadd.f32 %v701, %v845
  %v847 = vpop.f32.mrb[0].mxu0
  %848 = vmatprep.mubr.f32.mxu0 0.0
  %849 = vmatmul.mubr.f32.gmra.mrb[0].mxu0 %v271
  %v850 = vpop.f32.mrb[0].mxu0
  %v851 = vadd.f32 %v706, %v850
  %v852 = vpop.f32.mrb[0].mxu0
  %853 = vmatprep.mubr.f32.mxu0 0.0
  %854 = vmatmul.mubr.f32.gmra.mrb[0].mxu0 %v276
  %v855 = vpop.f32.mrb[0].mxu0
  %v856 = vadd.f32 %v711, %v855
  %v857 = vpop.f32.mrb[0].mxu0
  %858 = vmatprep.mubr.f32.mxu0 0.0
  %859 = vmatmul.mubr.f32.gmra.mrb[0].mxu0 %v281
  %v860 = vpop.f32.mrb[0].mxu0
  %v861 = vadd.f32 %v716, %v860
  %v862 = vpop.f32.mrb[0].mxu0
  %863 = vmatprep.mubr.f32.mxu0 0.0
  %864 = vmatmul.mubr.f32.gmra.mrb[0].mxu0 %v286
  %v865 = vpop.f32.mrb[0].mxu0
  %v866 = vadd.f32 %v721, %v865
  %v867 = vpop.f32.mrb[0].mxu0
  %868 = vmatprep.mubr.f32.mxu0 0.0
  %869 = vmatmul.mubr.f32.gmra.mrb[0].mxu0 %v291
  %v870 = vpop.f32.mrb[0].mxu0
  %v871 = vadd.f32 %v726, %v870
  %v872 = vpop.f32.mrb[0].mxu0
  %873 = vmatprep.mubr.f32.mxu0 0.0
  %874 = vmatmul.mubr.f32.gmra.mrb[0].mxu0 %v296
  %v875 = vpop.f32.mrb[0].mxu0
  %v876 = vadd.f32 %v731, %v875
  %v877 = vpop.f32.mrb[0].mxu0
  %878 = vmatprep.mubr.f32.mxu0 0.0
  %879 = vmatmul.mubr.f32.gmra.mrb[0].mxu0 %v301
  %v880 = vpop.f32.mrb[0].mxu0
  %v881 = vadd.f32 %v736, %v880
  %v882 = vpop.f32.mrb[0].mxu0
  %883 = vdwg.mxu0
  %s884 = scalar_lea.vmem %s0, 256
  %v885 = vld [vmem:[%s884] sm:$0xff]
  %v886 = vld [vmem:[%s884 + $0x8] sm:$0xff]
  %v887 = vld [vmem:[%s884 + $0x10] sm:$0xff]
  %v888 = vld [vmem:[%s884 + $0x18] sm:$0xff]
  %v889 = vld [vmem:[%s884 + $0x20] sm:$0xff]
  %v890 = vld [vmem:[%s884 + $0x28] sm:$0xff]
  %v891 = vld [vmem:[%s884 + $0x30] sm:$0xff]
  %v892 = vld [vmem:[%s884 + $0x38] sm:$0xff]
  %v893 = vld [vmem:[%s884 + $0x40] sm:$0xff]
  %v894 = vld [vmem:[%s884 + $0x48] sm:$0xff]
  %v895 = vld [vmem:[%s884 + $0x50] sm:$0xff]
  %v896 = vld [vmem:[%s884 + $0x58] sm:$0xff]
  %v897 = vld [vmem:[%s884 + $0x60] sm:$0xff]
  %v898 = vld [vmem:[%s884 + $0x68] sm:$0xff]
  %v899 = vld [vmem:[%s884 + $0x70] sm:$0xff]
  %v900 = vld [vmem:[%s884 + $0x78] sm:$0xff]
  %901 = vset.pattern.permute.xlu0 0
  %902 = vperm.xlu0 %901, %v885
  %v903 = vpop.permute.xlu0 %902
  %904 = vset.pattern.permute.xlu0 0
  %905 = vperm.xlu0 %904, %v886
  %v906 = vpop.permute.xlu0 %905
  %907 = vset.pattern.permute.xlu0 0
  %908 = vperm.xlu0 %907, %v887
  %v909 = vpop.permute.xlu0 %908
  %910 = vset.pattern.permute.xlu0 0
  %911 = vperm.xlu0 %910, %v888
  %v912 = vpop.permute.xlu0 %911
  %913 = vset.pattern.permute.xlu0 0
  %914 = vperm.xlu0 %913, %v889
  %v915 = vpop.permute.xlu0 %914
  %916 = vset.pattern.permute.xlu0 0
  %917 = vperm.xlu0 %916, %v890
  %v918 = vpop.permute.xlu0 %917
  %919 = vset.pattern.permute.xlu0 0
  %920 = vperm.xlu0 %919, %v891
  %v921 = vpop.permute.xlu0 %920
  %922 = vset.pattern.permute.xlu0 0
  %923 = vperm.xlu0 %922, %v892
  %v924 = vpop.permute.xlu0 %923
  %925 = vset.pattern.permute.xlu0 0
  %926 = vperm.xlu0 %925, %v893
  %v927 = vpop.permute.xlu0 %926
  %928 = vset.pattern.permute.xlu0 0
  %929 = vperm.xlu0 %928, %v894
  %v930 = vpop.permute.xlu0 %929
  %931 = vset.pattern.permute.xlu0 0
  %932 = vperm.xlu0 %931, %v895
  %v933 = vpop.permute.xlu0 %932
  %934 = vset.pattern.permute.xlu0 0
  %935 = vperm.xlu0 %934, %v896
  %v936 = vpop.permute.xlu0 %935
  %937 = vset.pattern.permute.xlu0 0
  %938 = vperm.xlu0 %937, %v897
  %v939 = vpop.permute.xlu0 %938
  %940 = vset.pattern.permute.xlu0 0
  %941 = vperm.xlu0 %940, %v898
  %v942 = vpop.permute.xlu0 %941
  %943 = vset.pattern.permute.xlu0 0
  %944 = vperm.xlu0 %943, %v899
  %v945 = vpop.permute.xlu0 %944
  %946 = vset.pattern.permute.xlu0 0
  %947 = vperm.xlu0 %946, %v900
  %v948 = vpop.permute.xlu0 %947
  %vm949 = vcmp.eq.s32.totalorder %v903, %v30
  %vm950 = vcmp.eq.s32.totalorder %v906, %v30
  %vm951 = vcmp.eq.s32.totalorder %v909, %v30
  %vm952 = vcmp.eq.s32.totalorder %v912, %v30
  %vm953 = vcmp.eq.s32.totalorder %v915, %v30
  %vm954 = vcmp.eq.s32.totalorder %v918, %v30
  %vm955 = vcmp.eq.s32.totalorder %v921, %v30
  %vm956 = vcmp.eq.s32.totalorder %v924, %v30
  %vm957 = vcmp.eq.s32.totalorder %v927, %v30
  %vm958 = vcmp.eq.s32.totalorder %v930, %v30
  %vm959 = vcmp.eq.s32.totalorder %v933, %v30
  %vm960 = vcmp.eq.s32.totalorder %v936, %v30
  %vm961 = vcmp.eq.s32.totalorder %v939, %v30
  %vm962 = vcmp.eq.s32.totalorder %v942, %v30
  %vm963 = vcmp.eq.s32.totalorder %v945, %v30
  %vm964 = vcmp.eq.s32.totalorder %v948, %v30
  %v965 = vsel %vm949, 1, 0
  %v966 = vsel %vm950, 1, 0
  %v967 = vsel %vm951, 1, 0
  %v968 = vsel %vm952, 1, 0
  %v969 = vsel %vm953, 1, 0
  %v970 = vsel %vm954, 1, 0
  %v971 = vsel %vm955, 1, 0
  %v972 = vsel %vm956, 1, 0
  %v973 = vsel %vm957, 1, 0
  %v974 = vsel %vm958, 1, 0
  %v975 = vsel %vm959, 1, 0
  %v976 = vsel %vm960, 1, 0
  %v977 = vsel %vm961, 1, 0
  %v978 = vsel %vm962, 1, 0
  %v979 = vsel %vm963, 1, 0
  %v980 = vsel %vm964, 1, 0
  %v981 = vcvt.s32.f32 %v965
  %v982 = vcvt.s32.f32 %v966
  %v983 = vcvt.s32.f32 %v967
  %v984 = vcvt.s32.f32 %v968
  %v985 = vcvt.s32.f32 %v969
  %v986 = vcvt.s32.f32 %v970
  %v987 = vcvt.s32.f32 %v971
  %v988 = vcvt.s32.f32 %v972
  %v989 = vcvt.s32.f32 %v973
  %v990 = vcvt.s32.f32 %v974
  %v991 = vcvt.s32.f32 %v975
  %v992 = vcvt.s32.f32 %v976
  %v993 = vcvt.s32.f32 %v977
  %v994 = vcvt.s32.f32 %v978
  %v995 = vcvt.s32.f32 %v979
  %v996 = vcvt.s32.f32 %v980
  %997 = vmatprep.subr.mxu0 0.0
  %998 = vmatpush1.msra.mxu0 %v31
  %999 = vmatprep.subr.mxu0 0.0
  %1000 = vmatpush1.msra.mxu0 %v32
  %1001 = vmatprep.subr.mxu0 0.0
  %1002 = vmatpush1.msra.mxu0 %v33
  %1003 = vmatprep.subr.mxu0 0.0
  %1004 = vmatpush1.msra.mxu0 %v34
  %1005 = vmatprep.subr.mxu0 0.0
  %1006 = vmatpush1.msra.mxu0 %v35
  %1007 = vmatprep.subr.mxu0 0.0
  %1008 = vmatpush1.msra.mxu0 %v36
  %1009 = vmatprep.subr.mxu0 0.0
  %1010 = vmatpush1.msra.mxu0 %v37
  %1011 = vmatprep.subr.mxu0 0.0
  %1012 = vmatpush1.msra.mxu0 %v38
  %1013 = vmatprep.subr.mxu0 0.0
  %1014 = vmatpush1.msra.mxu0 %v39
  %1015 = vmatprep.subr.mxu0 0.0
  %1016 = vmatpush1.msra.mxu0 %v40
  %1017 = vmatprep.subr.mxu0 0.0
  %1018 = vmatpush1.msra.mxu0 %v41
  %1019 = vmatprep.subr.mxu0 0.0
  %1020 = vmatpush1.msra.mxu0 %v42
  %1021 = vmatprep.subr.mxu0 0.0
  %1022 = vmatpush1.msra.mxu0 %v43
  %1023 = vmatprep.subr.mxu0 0.0
  %1024 = vmatpush1.msra.mxu0 %v44
  %1025 = vmatprep.subr.mxu0 0.0
  %1026 = vmatpush1.msra.mxu0 %v45
  %1027 = vmatprep.subr.mxu0 0.0
  %1028 = vmatpush1.msra.mxu0 %v46
  %1029 = vmatprep.subr.mxu0 0.0
  %1030 = vmatpush1.msra.mxu0 0.0
  %1031 = vmatprep.subr.mxu0 0.0
  %1032 = vmatpush1.msra.mxu0 0.0
  %1033 = vmatprep.subr.mxu0 0.0
  %1034 = vmatpush1.msra.mxu0 0.0
  %1035 = vmatprep.subr.mxu0 0.0
  %1036 = vmatpush1.msra.mxu0 0.0
  %1037 = vmatprep.subr.mxu0 0.0
  %1038 = vmatpush1.msra.mxu0 0.0
  %1039 = vmatprep.subr.mxu0 0.0
  %1040 = vmatpush1.msra.mxu0 0.0
  %1041 = vmatprep.subr.mxu0 0.0
  %1042 = vmatpush1.msra.mxu0 0.0
  %1043 = vmatprep.subr.mxu0 0.0
  %1044 = vmatpush1.msra.mxu0 0.0
  %1045 = vmatprep.subr.mxu0 0.0
  %1046 = vmatpush1.msra.mxu0 0.0
  %1047 = vmatprep.subr.mxu0 0.0
  %1048 = vmatpush1.msra.mxu0 0.0
  %1049 = vmatprep.subr.mxu0 0.0
  %1050 = vmatpush1.msra.mxu0 0.0
  %1051 = vmatprep.subr.mxu0 0.0
  %1052 = vmatpush1.msra.mxu0 0.0
  %1053 = vmatprep.subr.mxu0 0.0
  %1054 = vmatpush1.msra.mxu0 0.0
  %1055 = vmatprep.subr.mxu0 0.0
  %1056 = vmatpush1.msra.mxu0 0.0
  %1057 = vmatprep.subr.mxu0 0.0
  %1058 = vmatpush1.msra.mxu0 0.0
  %1059 = vmatprep.subr.mxu0 0.0
  %1060 = vmatpush1.msra.mxu0 0.0
  %1061 = vmatprep.mubr.f32.mxu0 0.0
  %1062 = vmatmul.mubr.f32.gmra.mrb[0].mxu0 %v981
  %v1063 = vpop.f32.mrb[0].mxu0
  %v1064 = vadd.f32 0.0, %v1063
  %v1065 = vpop.f32.mrb[0].mxu0
  %1066 = vmatprep.mubr.f32.mxu0 0.0
  %1067 = vmatmul.mubr.f32.gmra.mrb[0].mxu0 %v982
  %v1068 = vpop.f32.mrb[0].mxu0
  %v1069 = vadd.f32 0.0, %v1068
  %v1070 = vpop.f32.mrb[0].mxu0
  %1071 = vmatprep.mubr.f32.mxu0 0.0
  %1072 = vmatmul.mubr.f32.gmra.mrb[0].mxu0 %v983
  %v1073 = vpop.f32.mrb[0].mxu0
  %v1074 = vadd.f32 0.0, %v1073
  %v1075 = vpop.f32.mrb[0].mxu0
  %1076 = vmatprep.mubr.f32.mxu0 0.0
  %1077 = vmatmul.mubr.f32.gmra.mrb[0].mxu0 %v984
  %v1078 = vpop.f32.mrb[0].mxu0
  %v1079 = vadd.f32 0.0, %v1078
  %v1080 = vpop.f32.mrb[0].mxu0
  %1081 = vmatprep.mubr.f32.mxu0 0.0
  %1082 = vmatmul.mubr.f32.gmra.mrb[0].mxu0 %v985
  %v1083 = vpop.f32.mrb[0].mxu0
  %v1084 = vadd.f32 0.0, %v1083
  %v1085 = vpop.f32.mrb[0].mxu0
  %1086 = vmatprep.mubr.f32.mxu0 0.0
  %1087 = vmatmul.mubr.f32.gmra.mrb[0].mxu0 %v986
  %v1088 = vpop.f32.mrb[0].mxu0
  %v1089 = vadd.f32 0.0, %v1088
  %v1090 = vpop.f32.mrb[0].mxu0
  %1091 = vmatprep.mubr.f32.mxu0 0.0
  %1092 = vmatmul.mubr.f32.gmra.mrb[0].mxu0 %v987
  %v1093 = vpop.f32.mrb[0].mxu0
  %v1094 = vadd.f32 0.0, %v1093
  %v1095 = vpop.f32.mrb[0].mxu0
  %1096 = vmatprep.mubr.f32.mxu0 0.0
  %1097 = vmatmul.mubr.f32.gmra.mrb[0].mxu0 %v988
  %v1098 = vpop.f32.mrb[0].mxu0
  %v1099 = vadd.f32 0.0, %v1098
  %v1100 = vpop.f32.mrb[0].mxu0
  %1101 = vmatprep.mubr.f32.mxu0 0.0
  %1102 = vmatmul.mubr.f32.gmra.mrb[0].mxu0 %v989
  %v1103 = vpop.f32.mrb[0].mxu0
  %v1104 = vadd.f32 0.0, %v1103
  %v1105 = vpop.f32.mrb[0].mxu0
  %1106 = vmatprep.mubr.f32.mxu0 0.0
  %1107 = vmatmul.mubr.f32.gmra.mrb[0].mxu0 %v990
  %v1108 = vpop.f32.mrb[0].mxu0
  %v1109 = vadd.f32 0.0, %v1108
  %v1110 = vpop.f32.mrb[0].mxu0
  %1111 = vmatprep.mubr.f32.mxu0 0.0
  %1112 = vmatmul.mubr.f32.gmra.mrb[0].mxu0 %v991
  %v1113 = vpop.f32.mrb[0].mxu0
  %v1114 = vadd.f32 0.0, %v1113
  %v1115 = vpop.f32.mrb[0].mxu0
  %1116 = vmatprep.mubr.f32.mxu0 0.0
  %1117 = vmatmul.mubr.f32.gmra.mrb[0].mxu0 %v992
  %v1118 = vpop.f32.mrb[0].mxu0
  %v1119 = vadd.f32 0.0, %v1118
  %v1120 = vpop.f32.mrb[0].mxu0
  %1121 = vmatprep.mubr.f32.mxu0 0.0
  %1122 = vmatmul.mubr.f32.gmra.mrb[0].mxu0 %v993
  %v1123 = vpop.f32.mrb[0].mxu0
  %v1124 = vadd.f32 0.0, %v1123
  %v1125 = vpop.f32.mrb[0].mxu0
  %1126 = vmatprep.mubr.f32.mxu0 0.0
  %1127 = vmatmul.mubr.f32.gmra.mrb[0].mxu0 %v994
  %v1128 = vpop.f32.mrb[0].mxu0
  %v1129 = vadd.f32 0.0, %v1128
  %v1130 = vpop.f32.mrb[0].mxu0
  %1131 = vmatprep.mubr.f32.mxu0 0.0
  %1132 = vmatmul.mubr.f32.gmra.mrb[0].mxu0 %v995
  %v1133 = vpop.f32.mrb[0].mxu0
  %v1134 = vadd.f32 0.0, %v1133
  %v1135 = vpop.f32.mrb[0].mxu0
  %1136 = vmatprep.mubr.f32.mxu0 0.0
  %1137 = vmatmul.mubr.f32.gmra.mrb[0].mxu0 %v996
  %v1138 = vpop.f32.mrb[0].mxu0
  %v1139 = vadd.f32 0.0, %v1138
  %v1140 = vpop.f32.mrb[0].mxu0
  %1141 = vdwg.mxu0
  %v1142 = vld [vmem:[%s2 + $0x100] sm:$0xff]
  %v1143 = vld [vmem:[%s2 + $0x108] sm:$0xff]
  %v1144 = vld [vmem:[%s2 + $0x110] sm:$0xff]
  %v1145 = vld [vmem:[%s2 + $0x118] sm:$0xff]
  %v1146 = vld [vmem:[%s2 + $0x120] sm:$0xff]
  %v1147 = vld [vmem:[%s2 + $0x128] sm:$0xff]
  %v1148 = vld [vmem:[%s2 + $0x130] sm:$0xff]
  %v1149 = vld [vmem:[%s2 + $0x138] sm:$0xff]
  %v1150 = vld [vmem:[%s2 + $0x140] sm:$0xff]
  %v1151 = vld [vmem:[%s2 + $0x148] sm:$0xff]
  %v1152 = vld [vmem:[%s2 + $0x150] sm:$0xff]
  %v1153 = vld [vmem:[%s2 + $0x158] sm:$0xff]
  %v1154 = vld [vmem:[%s2 + $0x160] sm:$0xff]
  %v1155 = vld [vmem:[%s2 + $0x168] sm:$0xff]
  %v1156 = vld [vmem:[%s2 + $0x170] sm:$0xff]
  %v1157 = vld [vmem:[%s2 + $0x178] sm:$0xff]
  %1158 = vmatprep.subr.mxu0 0.0
  %1159 = vmatpush1.msra.mxu0 %v1142
  %1160 = vmatprep.subr.mxu0 0.0
  %1161 = vmatpush1.msra.mxu0 %v1143
  %1162 = vmatprep.subr.mxu0 0.0
  %1163 = vmatpush1.msra.mxu0 %v1144
  %1164 = vmatprep.subr.mxu0 0.0
  %1165 = vmatpush1.msra.mxu0 %v1145
  %1166 = vmatprep.subr.mxu0 0.0
  %1167 = vmatpush1.msra.mxu0 %v1146
  %1168 = vmatprep.subr.mxu0 0.0
  %1169 = vmatpush1.msra.mxu0 %v1147
  %1170 = vmatprep.subr.mxu0 0.0
  %1171 = vmatpush1.msra.mxu0 %v1148
  %1172 = vmatprep.subr.mxu0 0.0
  %1173 = vmatpush1.msra.mxu0 %v1149
  %1174 = vmatprep.subr.mxu0 0.0
  %1175 = vmatpush1.msra.mxu0 %v1150
  %1176 = vmatprep.subr.mxu0 0.0
  %1177 = vmatpush1.msra.mxu0 %v1151
  %1178 = vmatprep.subr.mxu0 0.0
  %1179 = vmatpush1.msra.mxu0 %v1152
  %1180 = vmatprep.subr.mxu0 0.0
  %1181 = vmatpush1.msra.mxu0 %v1153
  %1182 = vmatprep.subr.mxu0 0.0
  %1183 = vmatpush1.msra.mxu0 %v1154
  %1184 = vmatprep.subr.mxu0 0.0
  %1185 = vmatpush1.msra.mxu0 %v1155
  %1186 = vmatprep.subr.mxu0 0.0
  %1187 = vmatpush1.msra.mxu0 %v1156
  %1188 = vmatprep.subr.mxu0 0.0
  %1189 = vmatpush1.msra.mxu0 %v1157
  %1190 = vmatprep.subr.mxu0 0.0
  %1191 = vmatpush1.msra.mxu0 0.0
  %1192 = vmatprep.subr.mxu0 0.0
  %1193 = vmatpush1.msra.mxu0 0.0
  %1194 = vmatprep.subr.mxu0 0.0
  %1195 = vmatpush1.msra.mxu0 0.0
  %1196 = vmatprep.subr.mxu0 0.0
  %1197 = vmatpush1.msra.mxu0 0.0
  %1198 = vmatprep.subr.mxu0 0.0
  %1199 = vmatpush1.msra.mxu0 0.0
  %1200 = vmatprep.subr.mxu0 0.0
  %1201 = vmatpush1.msra.mxu0 0.0
  %1202 = vmatprep.subr.mxu0 0.0
  %1203 = vmatpush1.msra.mxu0 0.0
  %1204 = vmatprep.subr.mxu0 0.0
  %1205 = vmatpush1.msra.mxu0 0.0
  %1206 = vmatprep.subr.mxu0 0.0
  %1207 = vmatpush1.msra.mxu0 0.0
  %1208 = vmatprep.subr.mxu0 0.0
  %1209 = vmatpush1.msra.mxu0 0.0
  %1210 = vmatprep.subr.mxu0 0.0
  %1211 = vmatpush1.msra.mxu0 0.0
  %1212 = vmatprep.subr.mxu0 0.0
  %1213 = vmatpush1.msra.mxu0 0.0
  %1214 = vmatprep.subr.mxu0 0.0
  %1215 = vmatpush1.msra.mxu0 0.0
  %1216 = vmatprep.subr.mxu0 0.0
  %1217 = vmatpush1.msra.mxu0 0.0
  %1218 = vmatprep.subr.mxu0 0.0
  %1219 = vmatpush1.msra.mxu0 0.0
  %1220 = vmatprep.subr.mxu0 0.0
  %1221 = vmatpush1.msra.mxu0 0.0
  %1222 = vmatprep.mubr.f32.mxu0 0.0
  %1223 = vmatmul.mubr.f32.gmra.mrb[0].mxu0 %v1064
  %v1224 = vpop.f32.mrb[0].mxu0
  %v1225 = vadd.f32 0.0, %v1224
  %v1226 = vpop.f32.mrb[0].mxu0
  %1227 = vmatprep.mubr.f32.mxu0 0.0
  %1228 = vmatmul.mubr.f32.gmra.mrb[0].mxu0 %v1069
  %v1229 = vpop.f32.mrb[0].mxu0
  %v1230 = vadd.f32 0.0, %v1229
  %v1231 = vpop.f32.mrb[0].mxu0
  %1232 = vmatprep.mubr.f32.mxu0 0.0
  %1233 = vmatmul.mubr.f32.gmra.mrb[0].mxu0 %v1074
  %v1234 = vpop.f32.mrb[0].mxu0
  %v1235 = vadd.f32 0.0, %v1234
  %v1236 = vpop.f32.mrb[0].mxu0
  %1237 = vmatprep.mubr.f32.mxu0 0.0
  %1238 = vmatmul.mubr.f32.gmra.mrb[0].mxu0 %v1079
  %v1239 = vpop.f32.mrb[0].mxu0
  %v1240 = vadd.f32 0.0, %v1239
  %v1241 = vpop.f32.mrb[0].mxu0
  %1242 = vmatprep.mubr.f32.mxu0 0.0
  %1243 = vmatmul.mubr.f32.gmra.mrb[0].mxu0 %v1084
  %v1244 = vpop.f32.mrb[0].mxu0
  %v1245 = vadd.f32 0.0, %v1244
  %v1246 = vpop.f32.mrb[0].mxu0
  %1247 = vmatprep.mubr.f32.mxu0 0.0
  %1248 = vmatmul.mubr.f32.gmra.mrb[0].mxu0 %v1089
  %v1249 = vpop.f32.mrb[0].mxu0
  %v1250 = vadd.f32 0.0, %v1249
  %v1251 = vpop.f32.mrb[0].mxu0
  %1252 = vmatprep.mubr.f32.mxu0 0.0
  %1253 = vmatmul.mubr.f32.gmra.mrb[0].mxu0 %v1094
  %v1254 = vpop.f32.mrb[0].mxu0
  %v1255 = vadd.f32 0.0, %v1254
  %v1256 = vpop.f32.mrb[0].mxu0
  %1257 = vmatprep.mubr.f32.mxu0 0.0
  %1258 = vmatmul.mubr.f32.gmra.mrb[0].mxu0 %v1099
  %v1259 = vpop.f32.mrb[0].mxu0
  %v1260 = vadd.f32 0.0, %v1259
  %v1261 = vpop.f32.mrb[0].mxu0
  %1262 = vmatprep.mubr.f32.mxu0 0.0
  %1263 = vmatmul.mubr.f32.gmra.mrb[0].mxu0 %v1104
  %v1264 = vpop.f32.mrb[0].mxu0
  %v1265 = vadd.f32 0.0, %v1264
  %v1266 = vpop.f32.mrb[0].mxu0
  %1267 = vmatprep.mubr.f32.mxu0 0.0
  %1268 = vmatmul.mubr.f32.gmra.mrb[0].mxu0 %v1109
  %v1269 = vpop.f32.mrb[0].mxu0
  %v1270 = vadd.f32 0.0, %v1269
  %v1271 = vpop.f32.mrb[0].mxu0
  %1272 = vmatprep.mubr.f32.mxu0 0.0
  %1273 = vmatmul.mubr.f32.gmra.mrb[0].mxu0 %v1114
  %v1274 = vpop.f32.mrb[0].mxu0
  %v1275 = vadd.f32 0.0, %v1274
  %v1276 = vpop.f32.mrb[0].mxu0
  %1277 = vmatprep.mubr.f32.mxu0 0.0
  %1278 = vmatmul.mubr.f32.gmra.mrb[0].mxu0 %v1119
  %v1279 = vpop.f32.mrb[0].mxu0
  %v1280 = vadd.f32 0.0, %v1279
  %v1281 = vpop.f32.mrb[0].mxu0
  %1282 = vmatprep.mubr.f32.mxu0 0.0
  %1283 = vmatmul.mubr.f32.gmra.mrb[0].mxu0 %v1124
  %v1284 = vpop.f32.mrb[0].mxu0
  %v1285 = vadd.f32 0.0, %v1284
  %v1286 = vpop.f32.mrb[0].mxu0
  %1287 = vmatprep.mubr.f32.mxu0 0.0
  %1288 = vmatmul.mubr.f32.gmra.mrb[0].mxu0 %v1129
  %v1289 = vpop.f32.mrb[0].mxu0
  %v1290 = vadd.f32 0.0, %v1289
  %v1291 = vpop.f32.mrb[0].mxu0
  %1292 = vmatprep.mubr.f32.mxu0 0.0
  %1293 = vmatmul.mubr.f32.gmra.mrb[0].mxu0 %v1134
  %v1294 = vpop.f32.mrb[0].mxu0
  %v1295 = vadd.f32 0.0, %v1294
  %v1296 = vpop.f32.mrb[0].mxu0
  %1297 = vmatprep.mubr.f32.mxu0 0.0
  %1298 = vmatmul.mubr.f32.gmra.mrb[0].mxu0 %v1139
  %v1299 = vpop.f32.mrb[0].mxu0
  %v1300 = vadd.f32 0.0, %v1299
  %v1301 = vpop.f32.mrb[0].mxu0
  %1302 = vdwg.mxu0
  %v1303 = vadd.f32 %v806, %v1225
  %v1304 = vadd.f32 %v811, %v1230
  %v1305 = vadd.f32 %v816, %v1235
  %v1306 = vadd.f32 %v821, %v1240
  %v1307 = vadd.f32 %v826, %v1245
  %v1308 = vadd.f32 %v831, %v1250
  %v1309 = vadd.f32 %v836, %v1255
  %v1310 = vadd.f32 %v841, %v1260
  %v1311 = vadd.f32 %v846, %v1265
  %v1312 = vadd.f32 %v851, %v1270
  %v1313 = vadd.f32 %v856, %v1275
  %v1314 = vadd.f32 %v861, %v1280
  %v1315 = vadd.f32 %v866, %v1285
  %v1316 = vadd.f32 %v871, %v1290
  %v1317 = vadd.f32 %v876, %v1295
  %v1318 = vadd.f32 %v881, %v1300
  %s1319 = scalar_lea.vmem %s0, 384
  %v1320 = vld [vmem:[%s1319] sm:$0xff]
  %v1321 = vld [vmem:[%s1319 + $0x8] sm:$0xff]
  %v1322 = vld [vmem:[%s1319 + $0x10] sm:$0xff]
  %v1323 = vld [vmem:[%s1319 + $0x18] sm:$0xff]
  %v1324 = vld [vmem:[%s1319 + $0x20] sm:$0xff]
  %v1325 = vld [vmem:[%s1319 + $0x28] sm:$0xff]
  %v1326 = vld [vmem:[%s1319 + $0x30] sm:$0xff]
  %v1327 = vld [vmem:[%s1319 + $0x38] sm:$0xff]
  %v1328 = vld [vmem:[%s1319 + $0x40] sm:$0xff]
  %v1329 = vld [vmem:[%s1319 + $0x48] sm:$0xff]
  %v1330 = vld [vmem:[%s1319 + $0x50] sm:$0xff]
  %v1331 = vld [vmem:[%s1319 + $0x58] sm:$0xff]
  %v1332 = vld [vmem:[%s1319 + $0x60] sm:$0xff]
  %v1333 = vld [vmem:[%s1319 + $0x68] sm:$0xff]
  %v1334 = vld [vmem:[%s1319 + $0x70] sm:$0xff]
  %v1335 = vld [vmem:[%s1319 + $0x78] sm:$0xff]
  %1336 = vset.pattern.permute.xlu0 0
  %1337 = vperm.xlu0 %1336, %v1320
  %v1338 = vpop.permute.xlu0 %1337
  %1339 = vset.pattern.permute.xlu0 0
  %1340 = vperm.xlu0 %1339, %v1321
  %v1341 = vpop.permute.xlu0 %1340
  %1342 = vset.pattern.permute.xlu0 0
  %1343 = vperm.xlu0 %1342, %v1322
  %v1344 = vpop.permute.xlu0 %1343
  %1345 = vset.pattern.permute.xlu0 0
  %1346 = vperm.xlu0 %1345, %v1323
  %v1347 = vpop.permute.xlu0 %1346
  %1348 = vset.pattern.permute.xlu0 0
  %1349 = vperm.xlu0 %1348, %v1324
  %v1350 = vpop.permute.xlu0 %1349
  %1351 = vset.pattern.permute.xlu0 0
  %1352 = vperm.xlu0 %1351, %v1325
  %v1353 = vpop.permute.xlu0 %1352
  %1354 = vset.pattern.permute.xlu0 0
  %1355 = vperm.xlu0 %1354, %v1326
  %v1356 = vpop.permute.xlu0 %1355
  %1357 = vset.pattern.permute.xlu0 0
  %1358 = vperm.xlu0 %1357, %v1327
  %v1359 = vpop.permute.xlu0 %1358
  %1360 = vset.pattern.permute.xlu0 0
  %1361 = vperm.xlu0 %1360, %v1328
  %v1362 = vpop.permute.xlu0 %1361
  %1363 = vset.pattern.permute.xlu0 0
  %1364 = vperm.xlu0 %1363, %v1329
  %v1365 = vpop.permute.xlu0 %1364
  %1366 = vset.pattern.permute.xlu0 0
  %1367 = vperm.xlu0 %1366, %v1330
  %v1368 = vpop.permute.xlu0 %1367
  %1369 = vset.pattern.permute.xlu0 0
  %1370 = vperm.xlu0 %1369, %v1331
  %v1371 = vpop.permute.xlu0 %1370
  %1372 = vset.pattern.permute.xlu0 0
  %1373 = vperm.xlu0 %1372, %v1332
  %v1374 = vpop.permute.xlu0 %1373
  %1375 = vset.pattern.permute.xlu0 0
  %1376 = vperm.xlu0 %1375, %v1333
  %v1377 = vpop.permute.xlu0 %1376
  %1378 = vset.pattern.permute.xlu0 0
  %1379 = vperm.xlu0 %1378, %v1334
  %v1380 = vpop.permute.xlu0 %1379
  %1381 = vset.pattern.permute.xlu0 0
  %1382 = vperm.xlu0 %1381, %v1335
  %v1383 = vpop.permute.xlu0 %1382
  %vm1384 = vcmp.eq.s32.totalorder %v1338, %v30
  %vm1385 = vcmp.eq.s32.totalorder %v1341, %v30
  %vm1386 = vcmp.eq.s32.totalorder %v1344, %v30
  %vm1387 = vcmp.eq.s32.totalorder %v1347, %v30
  %vm1388 = vcmp.eq.s32.totalorder %v1350, %v30
  %vm1389 = vcmp.eq.s32.totalorder %v1353, %v30
  %vm1390 = vcmp.eq.s32.totalorder %v1356, %v30
  %vm1391 = vcmp.eq.s32.totalorder %v1359, %v30
  %vm1392 = vcmp.eq.s32.totalorder %v1362, %v30
  %vm1393 = vcmp.eq.s32.totalorder %v1365, %v30
  %vm1394 = vcmp.eq.s32.totalorder %v1368, %v30
  %vm1395 = vcmp.eq.s32.totalorder %v1371, %v30
  %vm1396 = vcmp.eq.s32.totalorder %v1374, %v30
  %vm1397 = vcmp.eq.s32.totalorder %v1377, %v30
  %vm1398 = vcmp.eq.s32.totalorder %v1380, %v30
  %vm1399 = vcmp.eq.s32.totalorder %v1383, %v30
  %v1400 = vsel %vm1384, 1, 0
  %v1401 = vsel %vm1385, 1, 0
  %v1402 = vsel %vm1386, 1, 0
  %v1403 = vsel %vm1387, 1, 0
  %v1404 = vsel %vm1388, 1, 0
  %v1405 = vsel %vm1389, 1, 0
  %v1406 = vsel %vm1390, 1, 0
  %v1407 = vsel %vm1391, 1, 0
  %v1408 = vsel %vm1392, 1, 0
  %v1409 = vsel %vm1393, 1, 0
  %v1410 = vsel %vm1394, 1, 0
  %v1411 = vsel %vm1395, 1, 0
  %v1412 = vsel %vm1396, 1, 0
  %v1413 = vsel %vm1397, 1, 0
  %v1414 = vsel %vm1398, 1, 0
  %v1415 = vsel %vm1399, 1, 0
  %v1416 = vcvt.s32.f32 %v1400
  %v1417 = vcvt.s32.f32 %v1401
  %v1418 = vcvt.s32.f32 %v1402
  %v1419 = vcvt.s32.f32 %v1403
  %v1420 = vcvt.s32.f32 %v1404
  %v1421 = vcvt.s32.f32 %v1405
  %v1422 = vcvt.s32.f32 %v1406
  %v1423 = vcvt.s32.f32 %v1407
  %v1424 = vcvt.s32.f32 %v1408
  %v1425 = vcvt.s32.f32 %v1409
  %v1426 = vcvt.s32.f32 %v1410
  %v1427 = vcvt.s32.f32 %v1411
  %v1428 = vcvt.s32.f32 %v1412
  %v1429 = vcvt.s32.f32 %v1413
  %v1430 = vcvt.s32.f32 %v1414
  %v1431 = vcvt.s32.f32 %v1415
  %1432 = vmatprep.subr.mxu0 0.0
  %1433 = vmatpush1.msra.mxu0 %v31
  %1434 = vmatprep.subr.mxu0 0.0
  %1435 = vmatpush1.msra.mxu0 %v32
  %1436 = vmatprep.subr.mxu0 0.0
  %1437 = vmatpush1.msra.mxu0 %v33
  %1438 = vmatprep.subr.mxu0 0.0
  %1439 = vmatpush1.msra.mxu0 %v34
  %1440 = vmatprep.subr.mxu0 0.0
  %1441 = vmatpush1.msra.mxu0 %v35
  %1442 = vmatprep.subr.mxu0 0.0
  %1443 = vmatpush1.msra.mxu0 %v36
  %1444 = vmatprep.subr.mxu0 0.0
  %1445 = vmatpush1.msra.mxu0 %v37
  %1446 = vmatprep.subr.mxu0 0.0
  %1447 = vmatpush1.msra.mxu0 %v38
  %1448 = vmatprep.subr.mxu0 0.0
  %1449 = vmatpush1.msra.mxu0 %v39
  %1450 = vmatprep.subr.mxu0 0.0
  %1451 = vmatpush1.msra.mxu0 %v40
  %1452 = vmatprep.subr.mxu0 0.0
  %1453 = vmatpush1.msra.mxu0 %v41
  %1454 = vmatprep.subr.mxu0 0.0
  %1455 = vmatpush1.msra.mxu0 %v42
  %1456 = vmatprep.subr.mxu0 0.0
  %1457 = vmatpush1.msra.mxu0 %v43
  %1458 = vmatprep.subr.mxu0 0.0
  %1459 = vmatpush1.msra.mxu0 %v44
  %1460 = vmatprep.subr.mxu0 0.0
  %1461 = vmatpush1.msra.mxu0 %v45
  %1462 = vmatprep.subr.mxu0 0.0
  %1463 = vmatpush1.msra.mxu0 %v46
  %1464 = vmatprep.subr.mxu0 0.0
  %1465 = vmatpush1.msra.mxu0 0.0
  %1466 = vmatprep.subr.mxu0 0.0
  %1467 = vmatpush1.msra.mxu0 0.0
  %1468 = vmatprep.subr.mxu0 0.0
  %1469 = vmatpush1.msra.mxu0 0.0
  %1470 = vmatprep.subr.mxu0 0.0
  %1471 = vmatpush1.msra.mxu0 0.0
  %1472 = vmatprep.subr.mxu0 0.0
  %1473 = vmatpush1.msra.mxu0 0.0
  %1474 = vmatprep.subr.mxu0 0.0
  %1475 = vmatpush1.msra.mxu0 0.0
  %1476 = vmatprep.subr.mxu0 0.0
  %1477 = vmatpush1.msra.mxu0 0.0
  %1478 = vmatprep.subr.mxu0 0.0
  %1479 = vmatpush1.msra.mxu0 0.0
  %1480 = vmatprep.subr.mxu0 0.0
  %1481 = vmatpush1.msra.mxu0 0.0
  %1482 = vmatprep.subr.mxu0 0.0
  %1483 = vmatpush1.msra.mxu0 0.0
  %1484 = vmatprep.subr.mxu0 0.0
  %1485 = vmatpush1.msra.mxu0 0.0
  %1486 = vmatprep.subr.mxu0 0.0
  %1487 = vmatpush1.msra.mxu0 0.0
  %1488 = vmatprep.subr.mxu0 0.0
  %1489 = vmatpush1.msra.mxu0 0.0
  %1490 = vmatprep.subr.mxu0 0.0
  %1491 = vmatpush1.msra.mxu0 0.0
  %1492 = vmatprep.subr.mxu0 0.0
  %1493 = vmatpush1.msra.mxu0 0.0
  %1494 = vmatprep.subr.mxu0 0.0
  %1495 = vmatpush1.msra.mxu0 0.0
  %1496 = vmatprep.mubr.f32.mxu0 0.0
  %1497 = vmatmul.mubr.f32.gmra.mrb[0].mxu0 %v1416
  %v1498 = vpop.f32.mrb[0].mxu0
  %v1499 = vadd.f32 0.0, %v1498
  %v1500 = vpop.f32.mrb[0].mxu0
  %1501 = vmatprep.mubr.f32.mxu0 0.0
  %1502 = vmatmul.mubr.f32.gmra.mrb[0].mxu0 %v1417
  %v1503 = vpop.f32.mrb[0].mxu0
  %v1504 = vadd.f32 0.0, %v1503
  %v1505 = vpop.f32.mrb[0].mxu0
  %1506 = vmatprep.mubr.f32.mxu0 0.0
  %1507 = vmatmul.mubr.f32.gmra.mrb[0].mxu0 %v1418
  %v1508 = vpop.f32.mrb[0].mxu0
  %v1509 = vadd.f32 0.0, %v1508
  %v1510 = vpop.f32.mrb[0].mxu0
  %1511 = vmatprep.mubr.f32.mxu0 0.0
  %1512 = vmatmul.mubr.f32.gmra.mrb[0].mxu0 %v1419
  %v1513 = vpop.f32.mrb[0].mxu0
  %v1514 = vadd.f32 0.0, %v1513
  %v1515 = vpop.f32.mrb[0].mxu0
  %1516 = vmatprep.mubr.f32.mxu0 0.0
  %1517 = vmatmul.mubr.f32.gmra.mrb[0].mxu0 %v1420
  %v1518 = vpop.f32.mrb[0].mxu0
  %v1519 = vadd.f32 0.0, %v1518
  %v1520 = vpop.f32.mrb[0].mxu0
  %1521 = vmatprep.mubr.f32.mxu0 0.0
  %1522 = vmatmul.mubr.f32.gmra.mrb[0].mxu0 %v1421
  %v1523 = vpop.f32.mrb[0].mxu0
  %v1524 = vadd.f32 0.0, %v1523
  %v1525 = vpop.f32.mrb[0].mxu0
  %1526 = vmatprep.mubr.f32.mxu0 0.0
  %1527 = vmatmul.mubr.f32.gmra.mrb[0].mxu0 %v1422
  %v1528 = vpop.f32.mrb[0].mxu0
  %v1529 = vadd.f32 0.0, %v1528
  %v1530 = vpop.f32.mrb[0].mxu0
  %1531 = vmatprep.mubr.f32.mxu0 0.0
  %1532 = vmatmul.mubr.f32.gmra.mrb[0].mxu0 %v1423
  %v1533 = vpop.f32.mrb[0].mxu0
  %v1534 = vadd.f32 0.0, %v1533
  %v1535 = vpop.f32.mrb[0].mxu0
  %1536 = vmatprep.mubr.f32.mxu0 0.0
  %1537 = vmatmul.mubr.f32.gmra.mrb[0].mxu0 %v1424
  %v1538 = vpop.f32.mrb[0].mxu0
  %v1539 = vadd.f32 0.0, %v1538
  %v1540 = vpop.f32.mrb[0].mxu0
  %1541 = vmatprep.mubr.f32.mxu0 0.0
  %1542 = vmatmul.mubr.f32.gmra.mrb[0].mxu0 %v1425
  %v1543 = vpop.f32.mrb[0].mxu0
  %v1544 = vadd.f32 0.0, %v1543
  %v1545 = vpop.f32.mrb[0].mxu0
  %1546 = vmatprep.mubr.f32.mxu0 0.0
  %1547 = vmatmul.mubr.f32.gmra.mrb[0].mxu0 %v1426
  %v1548 = vpop.f32.mrb[0].mxu0
  %v1549 = vadd.f32 0.0, %v1548
  %v1550 = vpop.f32.mrb[0].mxu0
  %1551 = vmatprep.mubr.f32.mxu0 0.0
  %1552 = vmatmul.mubr.f32.gmra.mrb[0].mxu0 %v1427
  %v1553 = vpop.f32.mrb[0].mxu0
  %v1554 = vadd.f32 0.0, %v1553
  %v1555 = vpop.f32.mrb[0].mxu0
  %1556 = vmatprep.mubr.f32.mxu0 0.0
  %1557 = vmatmul.mubr.f32.gmra.mrb[0].mxu0 %v1428
  %v1558 = vpop.f32.mrb[0].mxu0
  %v1559 = vadd.f32 0.0, %v1558
  %v1560 = vpop.f32.mrb[0].mxu0
  %1561 = vmatprep.mubr.f32.mxu0 0.0
  %1562 = vmatmul.mubr.f32.gmra.mrb[0].mxu0 %v1429
  %v1563 = vpop.f32.mrb[0].mxu0
  %v1564 = vadd.f32 0.0, %v1563
  %v1565 = vpop.f32.mrb[0].mxu0
  %1566 = vmatprep.mubr.f32.mxu0 0.0
  %1567 = vmatmul.mubr.f32.gmra.mrb[0].mxu0 %v1430
  %v1568 = vpop.f32.mrb[0].mxu0
  %v1569 = vadd.f32 0.0, %v1568
  %v1570 = vpop.f32.mrb[0].mxu0
  %1571 = vmatprep.mubr.f32.mxu0 0.0
  %1572 = vmatmul.mubr.f32.gmra.mrb[0].mxu0 %v1431
  %v1573 = vpop.f32.mrb[0].mxu0
  %v1574 = vadd.f32 0.0, %v1573
  %v1575 = vpop.f32.mrb[0].mxu0
  %1576 = vdwg.mxu0
  %v1577 = vld [vmem:[%s2 + $0x180] sm:$0xff]
  %v1578 = vld [vmem:[%s2 + $0x188] sm:$0xff]
  %v1579 = vld [vmem:[%s2 + $0x190] sm:$0xff]
  %v1580 = vld [vmem:[%s2 + $0x198] sm:$0xff]
  %v1581 = vld [vmem:[%s2 + $0x1a0] sm:$0xff]
  %v1582 = vld [vmem:[%s2 + $0x1a8] sm:$0xff]
  %v1583 = vld [vmem:[%s2 + $0x1b0] sm:$0xff]
  %v1584 = vld [vmem:[%s2 + $0x1b8] sm:$0xff]
  %v1585 = vld [vmem:[%s2 + $0x1c0] sm:$0xff]
  %v1586 = vld [vmem:[%s2 + $0x1c8] sm:$0xff]
  %v1587 = vld [vmem:[%s2 + $0x1d0] sm:$0xff]
  %v1588 = vld [vmem:[%s2 + $0x1d8] sm:$0xff]
  %v1589 = vld [vmem:[%s2 + $0x1e0] sm:$0xff]
  %v1590 = vld [vmem:[%s2 + $0x1e8] sm:$0xff]
  %v1591 = vld [vmem:[%s2 + $0x1f0] sm:$0xff]
  %v1592 = vld [vmem:[%s2 + $0x1f8] sm:$0xff]
  %1593 = vmatprep.subr.mxu0 0.0
  %1594 = vmatpush1.msra.mxu0 %v1577
  %1595 = vmatprep.subr.mxu0 0.0
  %1596 = vmatpush1.msra.mxu0 %v1578
  %1597 = vmatprep.subr.mxu0 0.0
  %1598 = vmatpush1.msra.mxu0 %v1579
  %1599 = vmatprep.subr.mxu0 0.0
  %1600 = vmatpush1.msra.mxu0 %v1580
  %1601 = vmatprep.subr.mxu0 0.0
  %1602 = vmatpush1.msra.mxu0 %v1581
  %1603 = vmatprep.subr.mxu0 0.0
  %1604 = vmatpush1.msra.mxu0 %v1582
  %1605 = vmatprep.subr.mxu0 0.0
  %1606 = vmatpush1.msra.mxu0 %v1583
  %1607 = vmatprep.subr.mxu0 0.0
  %1608 = vmatpush1.msra.mxu0 %v1584
  %1609 = vmatprep.subr.mxu0 0.0
  %1610 = vmatpush1.msra.mxu0 %v1585
  %1611 = vmatprep.subr.mxu0 0.0
  %1612 = vmatpush1.msra.mxu0 %v1586
  %1613 = vmatprep.subr.mxu0 0.0
  %1614 = vmatpush1.msra.mxu0 %v1587
  %1615 = vmatprep.subr.mxu0 0.0
  %1616 = vmatpush1.msra.mxu0 %v1588
  %1617 = vmatprep.subr.mxu0 0.0
  %1618 = vmatpush1.msra.mxu0 %v1589
  %1619 = vmatprep.subr.mxu0 0.0
  %1620 = vmatpush1.msra.mxu0 %v1590
  %1621 = vmatprep.subr.mxu0 0.0
  %1622 = vmatpush1.msra.mxu0 %v1591
  %1623 = vmatprep.subr.mxu0 0.0
  %1624 = vmatpush1.msra.mxu0 %v1592
  %1625 = vmatprep.subr.mxu0 0.0
  %1626 = vmatpush1.msra.mxu0 0.0
  %1627 = vmatprep.subr.mxu0 0.0
  %1628 = vmatpush1.msra.mxu0 0.0
  %1629 = vmatprep.subr.mxu0 0.0
  %1630 = vmatpush1.msra.mxu0 0.0
  %1631 = vmatprep.subr.mxu0 0.0
  %1632 = vmatpush1.msra.mxu0 0.0
  %1633 = vmatprep.subr.mxu0 0.0
  %1634 = vmatpush1.msra.mxu0 0.0
  %1635 = vmatprep.subr.mxu0 0.0
  %1636 = vmatpush1.msra.mxu0 0.0
  %1637 = vmatprep.subr.mxu0 0.0
  %1638 = vmatpush1.msra.mxu0 0.0
  %1639 = vmatprep.subr.mxu0 0.0
  %1640 = vmatpush1.msra.mxu0 0.0
  %1641 = vmatprep.subr.mxu0 0.0
  %1642 = vmatpush1.msra.mxu0 0.0
  %1643 = vmatprep.subr.mxu0 0.0
  %1644 = vmatpush1.msra.mxu0 0.0
  %1645 = vmatprep.subr.mxu0 0.0
  %1646 = vmatpush1.msra.mxu0 0.0
  %1647 = vmatprep.subr.mxu0 0.0
  %1648 = vmatpush1.msra.mxu0 0.0
  %1649 = vmatprep.subr.mxu0 0.0
  %1650 = vmatpush1.msra.mxu0 0.0
  %1651 = vmatprep.subr.mxu0 0.0
  %1652 = vmatpush1.msra.mxu0 0.0
  %1653 = vmatprep.subr.mxu0 0.0
  %1654 = vmatpush1.msra.mxu0 0.0
  %1655 = vmatprep.subr.mxu0 0.0
  %1656 = vmatpush1.msra.mxu0 0.0
  %1657 = vmatprep.mubr.f32.mxu0 0.0
  %1658 = vmatmul.mubr.f32.gmra.mrb[0].mxu0 %v1499
  %v1659 = vpop.f32.mrb[0].mxu0
  %v1660 = vadd.f32 0.0, %v1659
  %v1661 = vpop.f32.mrb[0].mxu0
  %1662 = vmatprep.mubr.f32.mxu0 0.0
  %1663 = vmatmul.mubr.f32.gmra.mrb[0].mxu0 %v1504
  %v1664 = vpop.f32.mrb[0].mxu0
  %v1665 = vadd.f32 0.0, %v1664
  %v1666 = vpop.f32.mrb[0].mxu0
  %1667 = vmatprep.mubr.f32.mxu0 0.0
  %1668 = vmatmul.mubr.f32.gmra.mrb[0].mxu0 %v1509
  %v1669 = vpop.f32.mrb[0].mxu0
  %v1670 = vadd.f32 0.0, %v1669
  %v1671 = vpop.f32.mrb[0].mxu0
  %1672 = vmatprep.mubr.f32.mxu0 0.0
  %1673 = vmatmul.mubr.f32.gmra.mrb[0].mxu0 %v1514
  %v1674 = vpop.f32.mrb[0].mxu0
  %v1675 = vadd.f32 0.0, %v1674
  %v1676 = vpop.f32.mrb[0].mxu0
  %1677 = vmatprep.mubr.f32.mxu0 0.0
  %1678 = vmatmul.mubr.f32.gmra.mrb[0].mxu0 %v1519
  %v1679 = vpop.f32.mrb[0].mxu0
  %v1680 = vadd.f32 0.0, %v1679
  %v1681 = vpop.f32.mrb[0].mxu0
  %1682 = vmatprep.mubr.f32.mxu0 0.0
  %1683 = vmatmul.mubr.f32.gmra.mrb[0].mxu0 %v1524
  %v1684 = vpop.f32.mrb[0].mxu0
  %v1685 = vadd.f32 0.0, %v1684
  %v1686 = vpop.f32.mrb[0].mxu0
  %1687 = vmatprep.mubr.f32.mxu0 0.0
  %1688 = vmatmul.mubr.f32.gmra.mrb[0].mxu0 %v1529
  %v1689 = vpop.f32.mrb[0].mxu0
  %v1690 = vadd.f32 0.0, %v1689
  %v1691 = vpop.f32.mrb[0].mxu0
  %1692 = vmatprep.mubr.f32.mxu0 0.0
  %1693 = vmatmul.mubr.f32.gmra.mrb[0].mxu0 %v1534
  %v1694 = vpop.f32.mrb[0].mxu0
  %v1695 = vadd.f32 0.0, %v1694
  %v1696 = vpop.f32.mrb[0].mxu0
  %1697 = vmatprep.mubr.f32.mxu0 0.0
  %1698 = vmatmul.mubr.f32.gmra.mrb[0].mxu0 %v1539
  %v1699 = vpop.f32.mrb[0].mxu0
  %v1700 = vadd.f32 0.0, %v1699
  %v1701 = vpop.f32.mrb[0].mxu0
  %1702 = vmatprep.mubr.f32.mxu0 0.0
  %1703 = vmatmul.mubr.f32.gmra.mrb[0].mxu0 %v1544
  %v1704 = vpop.f32.mrb[0].mxu0
  %v1705 = vadd.f32 0.0, %v1704
  %v1706 = vpop.f32.mrb[0].mxu0
  %1707 = vmatprep.mubr.f32.mxu0 0.0
  %1708 = vmatmul.mubr.f32.gmra.mrb[0].mxu0 %v1549
  %v1709 = vpop.f32.mrb[0].mxu0
  %v1710 = vadd.f32 0.0, %v1709
  %v1711 = vpop.f32.mrb[0].mxu0
  %1712 = vmatprep.mubr.f32.mxu0 0.0
  %1713 = vmatmul.mubr.f32.gmra.mrb[0].mxu0 %v1554
  %v1714 = vpop.f32.mrb[0].mxu0
  %v1715 = vadd.f32 0.0, %v1714
  %v1716 = vpop.f32.mrb[0].mxu0
  %1717 = vmatprep.mubr.f32.mxu0 0.0
  %1718 = vmatmul.mubr.f32.gmra.mrb[0].mxu0 %v1559
  %v1719 = vpop.f32.mrb[0].mxu0
  %v1720 = vadd.f32 0.0, %v1719
  %v1721 = vpop.f32.mrb[0].mxu0
  %1722 = vmatprep.mubr.f32.mxu0 0.0
  %1723 = vmatmul.mubr.f32.gmra.mrb[0].mxu0 %v1564
  %v1724 = vpop.f32.mrb[0].mxu0
  %v1725 = vadd.f32 0.0, %v1724
  %v1726 = vpop.f32.mrb[0].mxu0
  %1727 = vmatprep.mubr.f32.mxu0 0.0
  %1728 = vmatmul.mubr.f32.gmra.mrb[0].mxu0 %v1569
  %v1729 = vpop.f32.mrb[0].mxu0
  %v1730 = vadd.f32 0.0, %v1729
  %v1731 = vpop.f32.mrb[0].mxu0
  %1732 = vmatprep.mubr.f32.mxu0 0.0
  %1733 = vmatmul.mubr.f32.gmra.mrb[0].mxu0 %v1574
  %v1734 = vpop.f32.mrb[0].mxu0
  %v1735 = vadd.f32 0.0, %v1734
  %v1736 = vpop.f32.mrb[0].mxu0
  %1737 = vdwg.mxu0
  %v1738 = vadd.f32 %v1303, %v1660
  %v1739 = vadd.f32 %v1304, %v1665
  %v1740 = vadd.f32 %v1305, %v1670
  %v1741 = vadd.f32 %v1306, %v1675
  %v1742 = vadd.f32 %v1307, %v1680
  %v1743 = vadd.f32 %v1308, %v1685
  %v1744 = vadd.f32 %v1309, %v1690
  %v1745 = vadd.f32 %v1310, %v1695
  %v1746 = vadd.f32 %v1311, %v1700
  %v1747 = vadd.f32 %v1312, %v1705
  %v1748 = vadd.f32 %v1313, %v1710
  %v1749 = vadd.f32 %v1314, %v1715
  %v1750 = vadd.f32 %v1315, %v1720
  %v1751 = vadd.f32 %v1316, %v1725
  %v1752 = vadd.f32 %v1317, %v1730
  %v1753 = vadd.f32 %v1318, %v1735
  %s1754 = scalar_lea.vmem %s0, 512
  %v1755 = vld [vmem:[%s1754] sm:$0xff]
  %v1756 = vld [vmem:[%s1754 + $0x8] sm:$0xff]
  %v1757 = vld [vmem:[%s1754 + $0x10] sm:$0xff]
  %v1758 = vld [vmem:[%s1754 + $0x18] sm:$0xff]
  %v1759 = vld [vmem:[%s1754 + $0x20] sm:$0xff]
  %v1760 = vld [vmem:[%s1754 + $0x28] sm:$0xff]
  %v1761 = vld [vmem:[%s1754 + $0x30] sm:$0xff]
  %v1762 = vld [vmem:[%s1754 + $0x38] sm:$0xff]
  %v1763 = vld [vmem:[%s1754 + $0x40] sm:$0xff]
  %v1764 = vld [vmem:[%s1754 + $0x48] sm:$0xff]
  %v1765 = vld [vmem:[%s1754 + $0x50] sm:$0xff]
  %v1766 = vld [vmem:[%s1754 + $0x58] sm:$0xff]
  %v1767 = vld [vmem:[%s1754 + $0x60] sm:$0xff]
  %v1768 = vld [vmem:[%s1754 + $0x68] sm:$0xff]
  %v1769 = vld [vmem:[%s1754 + $0x70] sm:$0xff]
  %v1770 = vld [vmem:[%s1754 + $0x78] sm:$0xff]
  %1771 = vset.pattern.permute.xlu0 0
  %1772 = vperm.xlu0 %1771, %v1755
  %v1773 = vpop.permute.xlu0 %1772
  %1774 = vset.pattern.permute.xlu0 0
  %1775 = vperm.xlu0 %1774, %v1756
  %v1776 = vpop.permute.xlu0 %1775
  %1777 = vset.pattern.permute.xlu0 0
  %1778 = vperm.xlu0 %1777, %v1757
  %v1779 = vpop.permute.xlu0 %1778
  %1780 = vset.pattern.permute.xlu0 0
  %1781 = vperm.xlu0 %1780, %v1758
  %v1782 = vpop.permute.xlu0 %1781
  %1783 = vset.pattern.permute.xlu0 0
  %1784 = vperm.xlu0 %1783, %v1759
  %v1785 = vpop.permute.xlu0 %1784
  %1786 = vset.pattern.permute.xlu0 0
  %1787 = vperm.xlu0 %1786, %v1760
  %v1788 = vpop.permute.xlu0 %1787
  %1789 = vset.pattern.permute.xlu0 0
  %1790 = vperm.xlu0 %1789, %v1761
  %v1791 = vpop.permute.xlu0 %1790
  %1792 = vset.pattern.permute.xlu0 0
  %1793 = vperm.xlu0 %1792, %v1762
  %v1794 = vpop.permute.xlu0 %1793
  %1795 = vset.pattern.permute.xlu0 0
  %1796 = vperm.xlu0 %1795, %v1763
  %v1797 = vpop.permute.xlu0 %1796
  %1798 = vset.pattern.permute.xlu0 0
  %1799 = vperm.xlu0 %1798, %v1764
  %v1800 = vpop.permute.xlu0 %1799
  %1801 = vset.pattern.permute.xlu0 0
  %1802 = vperm.xlu0 %1801, %v1765
  %v1803 = vpop.permute.xlu0 %1802
  %1804 = vset.pattern.permute.xlu0 0
  %1805 = vperm.xlu0 %1804, %v1766
  %v1806 = vpop.permute.xlu0 %1805
  %1807 = vset.pattern.permute.xlu0 0
  %1808 = vperm.xlu0 %1807, %v1767
  %v1809 = vpop.permute.xlu0 %1808
  %1810 = vset.pattern.permute.xlu0 0
  %1811 = vperm.xlu0 %1810, %v1768
  %v1812 = vpop.permute.xlu0 %1811
  %1813 = vset.pattern.permute.xlu0 0
  %1814 = vperm.xlu0 %1813, %v1769
  %v1815 = vpop.permute.xlu0 %1814
  %1816 = vset.pattern.permute.xlu0 0
  %1817 = vperm.xlu0 %1816, %v1770
  %v1818 = vpop.permute.xlu0 %1817
  %vm1819 = vcmp.eq.s32.totalorder %v1773, %v30
  %vm1820 = vcmp.eq.s32.totalorder %v1776, %v30
  %vm1821 = vcmp.eq.s32.totalorder %v1779, %v30
  %vm1822 = vcmp.eq.s32.totalorder %v1782, %v30
  %vm1823 = vcmp.eq.s32.totalorder %v1785, %v30
  %vm1824 = vcmp.eq.s32.totalorder %v1788, %v30
  %vm1825 = vcmp.eq.s32.totalorder %v1791, %v30
  %vm1826 = vcmp.eq.s32.totalorder %v1794, %v30
  %vm1827 = vcmp.eq.s32.totalorder %v1797, %v30
  %vm1828 = vcmp.eq.s32.totalorder %v1800, %v30
  %vm1829 = vcmp.eq.s32.totalorder %v1803, %v30
  %vm1830 = vcmp.eq.s32.totalorder %v1806, %v30
  %vm1831 = vcmp.eq.s32.totalorder %v1809, %v30
  %vm1832 = vcmp.eq.s32.totalorder %v1812, %v30
  %vm1833 = vcmp.eq.s32.totalorder %v1815, %v30
  %vm1834 = vcmp.eq.s32.totalorder %v1818, %v30
  %v1835 = vsel %vm1819, 1, 0
  %v1836 = vsel %vm1820, 1, 0
  %v1837 = vsel %vm1821, 1, 0
  %v1838 = vsel %vm1822, 1, 0
  %v1839 = vsel %vm1823, 1, 0
  %v1840 = vsel %vm1824, 1, 0
  %v1841 = vsel %vm1825, 1, 0
  %v1842 = vsel %vm1826, 1, 0
  %v1843 = vsel %vm1827, 1, 0
  %v1844 = vsel %vm1828, 1, 0
  %v1845 = vsel %vm1829, 1, 0
  %v1846 = vsel %vm1830, 1, 0
  %v1847 = vsel %vm1831, 1, 0
  %v1848 = vsel %vm1832, 1, 0
  %v1849 = vsel %vm1833, 1, 0
  %v1850 = vsel %vm1834, 1, 0
  %v1851 = vcvt.s32.f32 %v1835
  %v1852 = vcvt.s32.f32 %v1836
  %v1853 = vcvt.s32.f32 %v1837
  %v1854 = vcvt.s32.f32 %v1838
  %v1855 = vcvt.s32.f32 %v1839
  %v1856 = vcvt.s32.f32 %v1840
  %v1857 = vcvt.s32.f32 %v1841
  %v1858 = vcvt.s32.f32 %v1842
  %v1859 = vcvt.s32.f32 %v1843
  %v1860 = vcvt.s32.f32 %v1844
  %v1861 = vcvt.s32.f32 %v1845
  %v1862 = vcvt.s32.f32 %v1846
  %v1863 = vcvt.s32.f32 %v1847
  %v1864 = vcvt.s32.f32 %v1848
  %v1865 = vcvt.s32.f32 %v1849
  %v1866 = vcvt.s32.f32 %v1850
  %1867 = vmatprep.subr.mxu0 0.0
  %1868 = vmatpush1.msra.mxu0 %v31
  %1869 = vmatprep.subr.mxu0 0.0
  %1870 = vmatpush1.msra.mxu0 %v32
  %1871 = vmatprep.subr.mxu0 0.0
  %1872 = vmatpush1.msra.mxu0 %v33
  %1873 = vmatprep.subr.mxu0 0.0
  %1874 = vmatpush1.msra.mxu0 %v34
  %1875 = vmatprep.subr.mxu0 0.0
  %1876 = vmatpush1.msra.mxu0 %v35
  %1877 = vmatprep.subr.mxu0 0.0
  %1878 = vmatpush1.msra.mxu0 %v36
  %1879 = vmatprep.subr.mxu0 0.0
  %1880 = vmatpush1.msra.mxu0 %v37
  %1881 = vmatprep.subr.mxu0 0.0
  %1882 = vmatpush1.msra.mxu0 %v38
  %1883 = vmatprep.subr.mxu0 0.0
  %1884 = vmatpush1.msra.mxu0 %v39
  %1885 = vmatprep.subr.mxu0 0.0
  %1886 = vmatpush1.msra.mxu0 %v40
  %1887 = vmatprep.subr.mxu0 0.0
  %1888 = vmatpush1.msra.mxu0 %v41
  %1889 = vmatprep.subr.mxu0 0.0
  %1890 = vmatpush1.msra.mxu0 %v42
  %1891 = vmatprep.subr.mxu0 0.0
  %1892 = vmatpush1.msra.mxu0 %v43
  %1893 = vmatprep.subr.mxu0 0.0
  %1894 = vmatpush1.msra.mxu0 %v44
  %1895 = vmatprep.subr.mxu0 0.0
  %1896 = vmatpush1.msra.mxu0 %v45
  %1897 = vmatprep.subr.mxu0 0.0
  %1898 = vmatpush1.msra.mxu0 %v46
  %1899 = vmatprep.subr.mxu0 0.0
  %1900 = vmatpush1.msra.mxu0 0.0
  %1901 = vmatprep.subr.mxu0 0.0
  %1902 = vmatpush1.msra.mxu0 0.0
  %1903 = vmatprep.subr.mxu0 0.0
  %1904 = vmatpush1.msra.mxu0 0.0
  %1905 = vmatprep.subr.mxu0 0.0
  %1906 = vmatpush1.msra.mxu0 0.0
  %1907 = vmatprep.subr.mxu0 0.0
  %1908 = vmatpush1.msra.mxu0 0.0
  %1909 = vmatprep.subr.mxu0 0.0
  %1910 = vmatpush1.msra.mxu0 0.0
  %1911 = vmatprep.subr.mxu0 0.0
  %1912 = vmatpush1.msra.mxu0 0.0
  %1913 = vmatprep.subr.mxu0 0.0
  %1914 = vmatpush1.msra.mxu0 0.0
  %1915 = vmatprep.subr.mxu0 0.0
  %1916 = vmatpush1.msra.mxu0 0.0
  %1917 = vmatprep.subr.mxu0 0.0
  %1918 = vmatpush1.msra.mxu0 0.0
  %1919 = vmatprep.subr.mxu0 0.0
  %1920 = vmatpush1.msra.mxu0 0.0
  %1921 = vmatprep.subr.mxu0 0.0
  %1922 = vmatpush1.msra.mxu0 0.0
  %1923 = vmatprep.subr.mxu0 0.0
  %1924 = vmatpush1.msra.mxu0 0.0
  %1925 = vmatprep.subr.mxu0 0.0
  %1926 = vmatpush1.msra.mxu0 0.0
  %1927 = vmatprep.subr.mxu0 0.0
  %1928 = vmatpush1.msra.mxu0 0.0
  %1929 = vmatprep.subr.mxu0 0.0
  %1930 = vmatpush1.msra.mxu0 0.0
  %1931 = vmatprep.mubr.f32.mxu0 0.0
  %1932 = vmatmul.mubr.f32.gmra.mrb[0].mxu0 %v1851
  %v1933 = vpop.f32.mrb[0].mxu0
  %v1934 = vadd.f32 0.0, %v1933
  %v1935 = vpop.f32.mrb[0].mxu0
  %1936 = vmatprep.mubr.f32.mxu0 0.0
  %1937 = vmatmul.mubr.f32.gmra.mrb[0].mxu0 %v1852
  %v1938 = vpop.f32.mrb[0].mxu0
  %v1939 = vadd.f32 0.0, %v1938
  %v1940 = vpop.f32.mrb[0].mxu0
  %1941 = vmatprep.mubr.f32.mxu0 0.0
  %1942 = vmatmul.mubr.f32.gmra.mrb[0].mxu0 %v1853
  %v1943 = vpop.f32.mrb[0].mxu0
  %v1944 = vadd.f32 0.0, %v1943
  %v1945 = vpop.f32.mrb[0].mxu0
  %1946 = vmatprep.mubr.f32.mxu0 0.0
  %1947 = vmatmul.mubr.f32.gmra.mrb[0].mxu0 %v1854
  %v1948 = vpop.f32.mrb[0].mxu0
  %v1949 = vadd.f32 0.0, %v1948
  %v1950 = vpop.f32.mrb[0].mxu0
  %1951 = vmatprep.mubr.f32.mxu0 0.0
  %1952 = vmatmul.mubr.f32.gmra.mrb[0].mxu0 %v1855
  %v1953 = vpop.f32.mrb[0].mxu0
  %v1954 = vadd.f32 0.0, %v1953
  %v1955 = vpop.f32.mrb[0].mxu0
  %1956 = vmatprep.mubr.f32.mxu0 0.0
  %1957 = vmatmul.mubr.f32.gmra.mrb[0].mxu0 %v1856
  %v1958 = vpop.f32.mrb[0].mxu0
  %v1959 = vadd.f32 0.0, %v1958
  %v1960 = vpop.f32.mrb[0].mxu0
  %1961 = vmatprep.mubr.f32.mxu0 0.0
  %1962 = vmatmul.mubr.f32.gmra.mrb[0].mxu0 %v1857
  %v1963 = vpop.f32.mrb[0].mxu0
  %v1964 = vadd.f32 0.0, %v1963
  %v1965 = vpop.f32.mrb[0].mxu0
  %1966 = vmatprep.mubr.f32.mxu0 0.0
  %1967 = vmatmul.mubr.f32.gmra.mrb[0].mxu0 %v1858
  %v1968 = vpop.f32.mrb[0].mxu0
  %v1969 = vadd.f32 0.0, %v1968
  %v1970 = vpop.f32.mrb[0].mxu0
  %1971 = vmatprep.mubr.f32.mxu0 0.0
  %1972 = vmatmul.mubr.f32.gmra.mrb[0].mxu0 %v1859
  %v1973 = vpop.f32.mrb[0].mxu0
  %v1974 = vadd.f32 0.0, %v1973
  %v1975 = vpop.f32.mrb[0].mxu0
  %1976 = vmatprep.mubr.f32.mxu0 0.0
  %1977 = vmatmul.mubr.f32.gmra.mrb[0].mxu0 %v1860
  %v1978 = vpop.f32.mrb[0].mxu0
  %v1979 = vadd.f32 0.0, %v1978
  %v1980 = vpop.f32.mrb[0].mxu0
  %1981 = vmatprep.mubr.f32.mxu0 0.0
  %1982 = vmatmul.mubr.f32.gmra.mrb[0].mxu0 %v1861
  %v1983 = vpop.f32.mrb[0].mxu0
  %v1984 = vadd.f32 0.0, %v1983
  %v1985 = vpop.f32.mrb[0].mxu0
  %1986 = vmatprep.mubr.f32.mxu0 0.0
  %1987 = vmatmul.mubr.f32.gmra.mrb[0].mxu0 %v1862
  %v1988 = vpop.f32.mrb[0].mxu0
  %v1989 = vadd.f32 0.0, %v1988
  %v1990 = vpop.f32.mrb[0].mxu0
  %1991 = vmatprep.mubr.f32.mxu0 0.0
  %1992 = vmatmul.mubr.f32.gmra.mrb[0].mxu0 %v1863
  %v1993 = vpop.f32.mrb[0].mxu0
  %v1994 = vadd.f32 0.0, %v1993
  %v1995 = vpop.f32.mrb[0].mxu0
  %1996 = vmatprep.mubr.f32.mxu0 0.0
  %1997 = vmatmul.mubr.f32.gmra.mrb[0].mxu0 %v1864
  %v1998 = vpop.f32.mrb[0].mxu0
  %v1999 = vadd.f32 0.0, %v1998
  %v2000 = vpop.f32.mrb[0].mxu0
  %2001 = vmatprep.mubr.f32.mxu0 0.0
  %2002 = vmatmul.mubr.f32.gmra.mrb[0].mxu0 %v1865
  %v2003 = vpop.f32.mrb[0].mxu0
  %v2004 = vadd.f32 0.0, %v2003
  %v2005 = vpop.f32.mrb[0].mxu0
  %2006 = vmatprep.mubr.f32.mxu0 0.0
  %2007 = vmatmul.mubr.f32.gmra.mrb[0].mxu0 %v1866
  %v2008 = vpop.f32.mrb[0].mxu0
  %v2009 = vadd.f32 0.0, %v2008
  %v2010 = vpop.f32.mrb[0].mxu0
  %2011 = vdwg.mxu0
  %v2012 = vld [vmem:[%s2 + $0x200] sm:$0xff]
  %v2013 = vld [vmem:[%s2 + $0x208] sm:$0xff]
  %v2014 = vld [vmem:[%s2 + $0x210] sm:$0xff]
  %v2015 = vld [vmem:[%s2 + $0x218] sm:$0xff]
  %v2016 = vld [vmem:[%s2 + $0x220] sm:$0xff]
  %v2017 = vld [vmem:[%s2 + $0x228] sm:$0xff]
  %v2018 = vld [vmem:[%s2 + $0x230] sm:$0xff]
  %v2019 = vld [vmem:[%s2 + $0x238] sm:$0xff]
  %v2020 = vld [vmem:[%s2 + $0x240] sm:$0xff]
  %v2021 = vld [vmem:[%s2 + $0x248] sm:$0xff]
  %v2022 = vld [vmem:[%s2 + $0x250] sm:$0xff]
  %v2023 = vld [vmem:[%s2 + $0x258] sm:$0xff]
  %v2024 = vld [vmem:[%s2 + $0x260] sm:$0xff]
  %v2025 = vld [vmem:[%s2 + $0x268] sm:$0xff]
  %v2026 = vld [vmem:[%s2 + $0x270] sm:$0xff]
  %v2027 = vld [vmem:[%s2 + $0x278] sm:$0xff]
  %2028 = vmatprep.subr.mxu0 0.0
  %2029 = vmatpush1.msra.mxu0 %v2012
  %2030 = vmatprep.subr.mxu0 0.0
  %2031 = vmatpush1.msra.mxu0 %v2013
  %2032 = vmatprep.subr.mxu0 0.0
  %2033 = vmatpush1.msra.mxu0 %v2014
  %2034 = vmatprep.subr.mxu0 0.0
  %2035 = vmatpush1.msra.mxu0 %v2015
  %2036 = vmatprep.subr.mxu0 0.0
  %2037 = vmatpush1.msra.mxu0 %v2016
  %2038 = vmatprep.subr.mxu0 0.0
  %2039 = vmatpush1.msra.mxu0 %v2017
  %2040 = vmatprep.subr.mxu0 0.0
  %2041 = vmatpush1.msra.mxu0 %v2018
  %2042 = vmatprep.subr.mxu0 0.0
  %2043 = vmatpush1.msra.mxu0 %v2019
  %2044 = vmatprep.subr.mxu0 0.0
  %2045 = vmatpush1.msra.mxu0 %v2020
  %2046 = vmatprep.subr.mxu0 0.0
  %2047 = vmatpush1.msra.mxu0 %v2021
  %2048 = vmatprep.subr.mxu0 0.0
  %2049 = vmatpush1.msra.mxu0 %v2022
  %2050 = vmatprep.subr.mxu0 0.0
  %2051 = vmatpush1.msra.mxu0 %v2023
  %2052 = vmatprep.subr.mxu0 0.0
  %2053 = vmatpush1.msra.mxu0 %v2024
  %2054 = vmatprep.subr.mxu0 0.0
  %2055 = vmatpush1.msra.mxu0 %v2025
  %2056 = vmatprep.subr.mxu0 0.0
  %2057 = vmatpush1.msra.mxu0 %v2026
  %2058 = vmatprep.subr.mxu0 0.0
  %2059 = vmatpush1.msra.mxu0 %v2027
  %2060 = vmatprep.subr.mxu0 0.0
  %2061 = vmatpush1.msra.mxu0 0.0
  %2062 = vmatprep.subr.mxu0 0.0
  %2063 = vmatpush1.msra.mxu0 0.0
  %2064 = vmatprep.subr.mxu0 0.0
  %2065 = vmatpush1.msra.mxu0 0.0
  %2066 = vmatprep.subr.mxu0 0.0
  %2067 = vmatpush1.msra.mxu0 0.0
  %2068 = vmatprep.subr.mxu0 0.0
  %2069 = vmatpush1.msra.mxu0 0.0
  %2070 = vmatprep.subr.mxu0 0.0
  %2071 = vmatpush1.msra.mxu0 0.0
  %2072 = vmatprep.subr.mxu0 0.0
  %2073 = vmatpush1.msra.mxu0 0.0
  %2074 = vmatprep.subr.mxu0 0.0
  %2075 = vmatpush1.msra.mxu0 0.0
  %2076 = vmatprep.subr.mxu0 0.0
  %2077 = vmatpush1.msra.mxu0 0.0
  %2078 = vmatprep.subr.mxu0 0.0
  %2079 = vmatpush1.msra.mxu0 0.0
  %2080 = vmatprep.subr.mxu0 0.0
  %2081 = vmatpush1.msra.mxu0 0.0
  %2082 = vmatprep.subr.mxu0 0.0
  %2083 = vmatpush1.msra.mxu0 0.0
  %2084 = vmatprep.subr.mxu0 0.0
  %2085 = vmatpush1.msra.mxu0 0.0
  %2086 = vmatprep.subr.mxu0 0.0
  %2087 = vmatpush1.msra.mxu0 0.0
  %2088 = vmatprep.subr.mxu0 0.0
  %2089 = vmatpush1.msra.mxu0 0.0
  %2090 = vmatprep.subr.mxu0 0.0
  %2091 = vmatpush1.msra.mxu0 0.0
  %2092 = vmatprep.mubr.f32.mxu0 0.0
  %2093 = vmatmul.mubr.f32.gmra.mrb[0].mxu0 %v1934
  %v2094 = vpop.f32.mrb[0].mxu0
  %v2095 = vadd.f32 0.0, %v2094
  %v2096 = vpop.f32.mrb[0].mxu0
  %2097 = vmatprep.mubr.f32.mxu0 0.0
  %2098 = vmatmul.mubr.f32.gmra.mrb[0].mxu0 %v1939
  %v2099 = vpop.f32.mrb[0].mxu0
  %v2100 = vadd.f32 0.0, %v2099
  %v2101 = vpop.f32.mrb[0].mxu0
  %2102 = vmatprep.mubr.f32.mxu0 0.0
  %2103 = vmatmul.mubr.f32.gmra.mrb[0].mxu0 %v1944
  %v2104 = vpop.f32.mrb[0].mxu0
  %v2105 = vadd.f32 0.0, %v2104
  %v2106 = vpop.f32.mrb[0].mxu0
  %2107 = vmatprep.mubr.f32.mxu0 0.0
  %2108 = vmatmul.mubr.f32.gmra.mrb[0].mxu0 %v1949
  %v2109 = vpop.f32.mrb[0].mxu0
  %v2110 = vadd.f32 0.0, %v2109
  %v2111 = vpop.f32.mrb[0].mxu0
  %2112 = vmatprep.mubr.f32.mxu0 0.0
  %2113 = vmatmul.mubr.f32.gmra.mrb[0].mxu0 %v1954
  %v2114 = vpop.f32.mrb[0].mxu0
  %v2115 = vadd.f32 0.0, %v2114
  %v2116 = vpop.f32.mrb[0].mxu0
  %2117 = vmatprep.mubr.f32.mxu0 0.0
  %2118 = vmatmul.mubr.f32.gmra.mrb[0].mxu0 %v1959
  %v2119 = vpop.f32.mrb[0].mxu0
  %v2120 = vadd.f32 0.0, %v2119
  %v2121 = vpop.f32.mrb[0].mxu0
  %2122 = vmatprep.mubr.f32.mxu0 0.0
  %2123 = vmatmul.mubr.f32.gmra.mrb[0].mxu0 %v1964
  %v2124 = vpop.f32.mrb[0].mxu0
  %v2125 = vadd.f32 0.0, %v2124
  %v2126 = vpop.f32.mrb[0].mxu0
  %2127 = vmatprep.mubr.f32.mxu0 0.0
  %2128 = vmatmul.mubr.f32.gmra.mrb[0].mxu0 %v1969
  %v2129 = vpop.f32.mrb[0].mxu0
  %v2130 = vadd.f32 0.0, %v2129
  %v2131 = vpop.f32.mrb[0].mxu0
  %2132 = vmatprep.mubr.f32.mxu0 0.0
  %2133 = vmatmul.mubr.f32.gmra.mrb[0].mxu0 %v1974
  %v2134 = vpop.f32.mrb[0].mxu0
  %v2135 = vadd.f32 0.0, %v2134
  %v2136 = vpop.f32.mrb[0].mxu0
  %2137 = vmatprep.mubr.f32.mxu0 0.0
  %2138 = vmatmul.mubr.f32.gmra.mrb[0].mxu0 %v1979
  %v2139 = vpop.f32.mrb[0].mxu0
  %v2140 = vadd.f32 0.0, %v2139
  %v2141 = vpop.f32.mrb[0].mxu0
  %2142 = vmatprep.mubr.f32.mxu0 0.0
  %2143 = vmatmul.mubr.f32.gmra.mrb[0].mxu0 %v1984
  %v2144 = vpop.f32.mrb[0].mxu0
  %v2145 = vadd.f32 0.0, %v2144
  %v2146 = vpop.f32.mrb[0].mxu0
  %2147 = vmatprep.mubr.f32.mxu0 0.0
  %2148 = vmatmul.mubr.f32.gmra.mrb[0].mxu0 %v1989
  %v2149 = vpop.f32.mrb[0].mxu0
  %v2150 = vadd.f32 0.0, %v2149
  %v2151 = vpop.f32.mrb[0].mxu0
  %2152 = vmatprep.mubr.f32.mxu0 0.0
  %2153 = vmatmul.mubr.f32.gmra.mrb[0].mxu0 %v1994
  %v2154 = vpop.f32.mrb[0].mxu0
  %v2155 = vadd.f32 0.0, %v2154
  %v2156 = vpop.f32.mrb[0].mxu0
  %2157 = vmatprep.mubr.f32.mxu0 0.0
  %2158 = vmatmul.mubr.f32.gmra.mrb[0].mxu0 %v1999
  %v2159 = vpop.f32.mrb[0].mxu0
  %v2160 = vadd.f32 0.0, %v2159
  %v2161 = vpop.f32.mrb[0].mxu0
  %2162 = vmatprep.mubr.f32.mxu0 0.0
  %2163 = vmatmul.mubr.f32.gmra.mrb[0].mxu0 %v2004
  %v2164 = vpop.f32.mrb[0].mxu0
  %v2165 = vadd.f32 0.0, %v2164
  %v2166 = vpop.f32.mrb[0].mxu0
  %2167 = vmatprep.mubr.f32.mxu0 0.0
  %2168 = vmatmul.mubr.f32.gmra.mrb[0].mxu0 %v2009
  %v2169 = vpop.f32.mrb[0].mxu0
  %v2170 = vadd.f32 0.0, %v2169
  %v2171 = vpop.f32.mrb[0].mxu0
  %2172 = vdwg.mxu0
  %v2173 = vadd.f32 %v1738, %v2095
  %v2174 = vadd.f32 %v1739, %v2100
  %v2175 = vadd.f32 %v1740, %v2105
  %v2176 = vadd.f32 %v1741, %v2110
  %v2177 = vadd.f32 %v1742, %v2115
  %v2178 = vadd.f32 %v1743, %v2120
  %v2179 = vadd.f32 %v1744, %v2125
  %v2180 = vadd.f32 %v1745, %v2130
  %v2181 = vadd.f32 %v1746, %v2135
  %v2182 = vadd.f32 %v1747, %v2140
  %v2183 = vadd.f32 %v1748, %v2145
  %v2184 = vadd.f32 %v1749, %v2150
  %v2185 = vadd.f32 %v1750, %v2155
  %v2186 = vadd.f32 %v1751, %v2160
  %v2187 = vadd.f32 %v1752, %v2165
  %v2188 = vadd.f32 %v1753, %v2170
  %v2189 = vld [vmem:[%s3] sm:$0x1]
  %v2191 = vlaneseq
  %v2192 = vshrl.u32 %v2191, 7
  %v2193 = vsub.s32 0, %v2192
  %v2194 = vrot.slane %v2189, %v2193
  %v2196 = vadd.f32 %v2173, %v2194
  %v2197 = vadd.f32 %v2174, %v2194
  %v2198 = vadd.f32 %v2175, %v2194
  %v2199 = vadd.f32 %v2176, %v2194
  %v2200 = vadd.f32 %v2177, %v2194
  %v2201 = vadd.f32 %v2178, %v2194
  %v2202 = vadd.f32 %v2179, %v2194
  %v2203 = vadd.f32 %v2180, %v2194
  %v2204 = vadd.f32 %v2181, %v2194
  %v2205 = vadd.f32 %v2182, %v2194
  %v2206 = vadd.f32 %v2183, %v2194
  %v2207 = vadd.f32 %v2184, %v2194
  %v2208 = vadd.f32 %v2185, %v2194
  %v2209 = vadd.f32 %v2186, %v2194
  %v2210 = vadd.f32 %v2187, %v2194
  %v2211 = vadd.f32 %v2188, %v2194
  %v2212 = vtanh.pop %v2196
  %v2213 = vtanh.pop %v2197
  %v2214 = vtanh.pop %v2198
  %v2215 = vtanh.pop %v2199
  %v2216 = vtanh.pop %v2200
  %v2217 = vtanh.pop %v2201
  %v2218 = vtanh.pop %v2202
  %v2219 = vtanh.pop %v2203
  %v2220 = vtanh.pop %v2204
  %v2221 = vtanh.pop %v2205
  %v2222 = vtanh.pop %v2206
  %v2223 = vtanh.pop %v2207
  %v2224 = vtanh.pop %v2208
  %v2225 = vtanh.pop %v2209
  %v2226 = vtanh.pop %v2210
  %v2227 = vtanh.pop %v2211
  %v2228 = vld [vmem:[%s4] sm:$0xff]
  %v2229 = vld [vmem:[%s4 + $0x8] sm:$0xff]
  %v2230 = vadd.f32 %v2212, %v2228
  %v2231 = vadd.f32 %v2213, %v2229
  %v2232 = vadd.f32 %v2214, %v2228
  %v2233 = vadd.f32 %v2215, %v2229
  %v2234 = vadd.f32 %v2216, %v2228
  %v2235 = vadd.f32 %v2217, %v2229
  %v2236 = vadd.f32 %v2218, %v2228
  %v2237 = vadd.f32 %v2219, %v2229
  %v2238 = vadd.f32 %v2220, %v2228
  %v2239 = vadd.f32 %v2221, %v2229
  %v2240 = vadd.f32 %v2222, %v2228
  %v2241 = vadd.f32 %v2223, %v2229
  %v2242 = vadd.f32 %v2224, %v2228
  %v2243 = vadd.f32 %v2225, %v2229
  %v2244 = vadd.f32 %v2226, %v2228
  %v2245 = vadd.f32 %v2227, %v2229
  %v2246 = vmax.f32 %v2230, %v2231
  %v2247 = vrot.slane %v2246, 4
  %v2248 = vmax.f32 %v2246, %v2247
  %v2249 = vrot.slane %v2248, 2
  %v2250 = vmax.f32 %v2248, %v2249
  %v2251 = vrot.slane %v2250, 1
  %v2252 = vmax.f32 %v2250, %v2251
  %v2253 = vmax.f32 %v2232, %v2233
  %v2254 = vrot.slane %v2253, 4
  %v2255 = vmax.f32 %v2253, %v2254
  %v2256 = vrot.slane %v2255, 2
  %v2257 = vmax.f32 %v2255, %v2256
  %v2258 = vrot.slane %v2257, 1
  %v2259 = vmax.f32 %v2257, %v2258
  %v2260 = vmax.f32 %v2234, %v2235
  %v2261 = vrot.slane %v2260, 4
  %v2262 = vmax.f32 %v2260, %v2261
  %v2263 = vrot.slane %v2262, 2
  %v2264 = vmax.f32 %v2262, %v2263
  %v2265 = vrot.slane %v2264, 1
  %v2266 = vmax.f32 %v2264, %v2265
  %v2267 = vmax.f32 %v2236, %v2237
  %v2268 = vrot.slane %v2267, 4
  %v2269 = vmax.f32 %v2267, %v2268
  %v2270 = vrot.slane %v2269, 2
  %v2271 = vmax.f32 %v2269, %v2270
  %v2272 = vrot.slane %v2271, 1
  %v2273 = vmax.f32 %v2271, %v2272
  %v2274 = vmax.f32 %v2238, %v2239
  %v2275 = vrot.slane %v2274, 4
  %v2276 = vmax.f32 %v2274, %v2275
  %v2277 = vrot.slane %v2276, 2
  %v2278 = vmax.f32 %v2276, %v2277
  %v2279 = vrot.slane %v2278, 1
  %v2280 = vmax.f32 %v2278, %v2279
  %v2281 = vmax.f32 %v2240, %v2241
  %v2282 = vrot.slane %v2281, 4
  %v2283 = vmax.f32 %v2281, %v2282
  %v2284 = vrot.slane %v2283, 2
  %v2285 = vmax.f32 %v2283, %v2284
  %v2286 = vrot.slane %v2285, 1
  %v2287 = vmax.f32 %v2285, %v2286
  %v2288 = vmax.f32 %v2242, %v2243
  %v2289 = vrot.slane %v2288, 4
  %v2290 = vmax.f32 %v2288, %v2289
  %v2291 = vrot.slane %v2290, 2
  %v2292 = vmax.f32 %v2290, %v2291
  %v2293 = vrot.slane %v2292, 1
  %v2294 = vmax.f32 %v2292, %v2293
  %v2295 = vmax.f32 %v2244, %v2245
  %v2296 = vrot.slane %v2295, 4
  %v2297 = vmax.f32 %v2295, %v2296
  %v2298 = vrot.slane %v2297, 2
  %v2299 = vmax.f32 %v2297, %v2298
  %v2300 = vrot.slane %v2299, 1
  %v2301 = vmax.f32 %v2299, %v2300
  %v2302 = vld [vmem:[%s5] sm:$0xff]
  %v2303 = vld [vmem:[%s5 + $0x8] sm:$0xff]
  %v2304 = vld [vmem:[%s5 + $0x10] sm:$0xff]
  %v2305 = vld [vmem:[%s5 + $0x18] sm:$0xff]
  %v2306 = vld [vmem:[%s5 + $0x20] sm:$0xff]
  %v2307 = vld [vmem:[%s5 + $0x28] sm:$0xff]
  %v2308 = vld [vmem:[%s5 + $0x30] sm:$0xff]
  %v2309 = vld [vmem:[%s5 + $0x38] sm:$0xff]
  %v2310 = vld [vmem:[%s5 + $0x40] sm:$0xff]
  %v2311 = vld [vmem:[%s5 + $0x48] sm:$0xff]
  %v2312 = vld [vmem:[%s5 + $0x50] sm:$0xff]
  %v2313 = vld [vmem:[%s5 + $0x58] sm:$0xff]
  %v2314 = vld [vmem:[%s5 + $0x60] sm:$0xff]
  %v2315 = vld [vmem:[%s5 + $0x68] sm:$0xff]
  %v2316 = vld [vmem:[%s5 + $0x70] sm:$0xff]
  %v2317 = vld [vmem:[%s5 + $0x78] sm:$0xff]
  %v2318 = vld [vmem:[%s6] sm:$0x1]
  %v2320 = vlaneseq
  %v2321 = vshrl.u32 %v2320, 7
  %v2322 = vsub.s32 0, %v2321
  %v2323 = vrot.slane %v2318, %v2322
  %vm2333 = vcmask 1041409
  %v2334 = vsel %vm2333, %v2259, %v2252
  %vm2335 = vcmask 1042434
  %v2336 = vsel %vm2335, %v2266, %v2334
  %vm2337 = vcmask 1043459
  %v2338 = vsel %vm2337, %v2273, %v2336
  %vm2339 = vcmask 1044484
  %v2340 = vsel %vm2339, %v2280, %v2338
  %vm2341 = vcmask 1045509
  %v2342 = vsel %vm2341, %v2287, %v2340
  %vm2343 = vcmask 1046534
  %v2344 = vsel %vm2343, %v2294, %v2342
  %vm2345 = vcmask 1047559
  %v2346 = vsel %vm2345, %v2301, %v2344
  %2348 = vmatprep.subr.mxu0 0.0
  %2349 = vmatpush1.msra.mxu0 %v2302
  %2350 = vmatprep.subr.mxu0 0.0
  %2351 = vmatpush1.msra.mxu0 %v2303
  %2352 = vmatprep.subr.mxu0 0.0
  %2353 = vmatpush1.msra.mxu0 %v2304
  %2354 = vmatprep.subr.mxu0 0.0
  %2355 = vmatpush1.msra.mxu0 %v2305
  %2356 = vmatprep.subr.mxu0 0.0
  %2357 = vmatpush1.msra.mxu0 %v2306
  %2358 = vmatprep.subr.mxu0 0.0
  %2359 = vmatpush1.msra.mxu0 %v2307
  %2360 = vmatprep.subr.mxu0 0.0
  %2361 = vmatpush1.msra.mxu0 %v2308
  %2362 = vmatprep.subr.mxu0 0.0
  %2363 = vmatpush1.msra.mxu0 %v2309
  %2364 = vmatprep.subr.mxu0 0.0
  %2365 = vmatpush1.msra.mxu0 %v2310
  %2366 = vmatprep.subr.mxu0 0.0
  %2367 = vmatpush1.msra.mxu0 %v2311
  %2368 = vmatprep.subr.mxu0 0.0
  %2369 = vmatpush1.msra.mxu0 %v2312
  %2370 = vmatprep.subr.mxu0 0.0
  %2371 = vmatpush1.msra.mxu0 %v2313
  %2372 = vmatprep.subr.mxu0 0.0
  %2373 = vmatpush1.msra.mxu0 %v2314
  %2374 = vmatprep.subr.mxu0 0.0
  %2375 = vmatpush1.msra.mxu0 %v2315
  %2376 = vmatprep.subr.mxu0 0.0
  %2377 = vmatpush1.msra.mxu0 %v2316
  %2378 = vmatprep.subr.mxu0 0.0
  %2379 = vmatpush1.msra.mxu0 %v2317
  %2380 = vmatprep.subr.mxu0 0.0
  %2381 = vmatpush1.msra.mxu0 0.0
  %2382 = vmatprep.subr.mxu0 0.0
  %2383 = vmatpush1.msra.mxu0 0.0
  %2384 = vmatprep.subr.mxu0 0.0
  %2385 = vmatpush1.msra.mxu0 0.0
  %2386 = vmatprep.subr.mxu0 0.0
  %2387 = vmatpush1.msra.mxu0 0.0
  %2388 = vmatprep.subr.mxu0 0.0
  %2389 = vmatpush1.msra.mxu0 0.0
  %2390 = vmatprep.subr.mxu0 0.0
  %2391 = vmatpush1.msra.mxu0 0.0
  %2392 = vmatprep.subr.mxu0 0.0
  %2393 = vmatpush1.msra.mxu0 0.0
  %2394 = vmatprep.subr.mxu0 0.0
  %2395 = vmatpush1.msra.mxu0 0.0
  %2396 = vmatprep.subr.mxu0 0.0
  %2397 = vmatpush1.msra.mxu0 0.0
  %2398 = vmatprep.subr.mxu0 0.0
  %2399 = vmatpush1.msra.mxu0 0.0
  %2400 = vmatprep.subr.mxu0 0.0
  %2401 = vmatpush1.msra.mxu0 0.0
  %2402 = vmatprep.subr.mxu0 0.0
  %2403 = vmatpush1.msra.mxu0 0.0
  %2404 = vmatprep.subr.mxu0 0.0
  %2405 = vmatpush1.msra.mxu0 0.0
  %2406 = vmatprep.subr.mxu0 0.0
  %2407 = vmatpush1.msra.mxu0 0.0
  %2408 = vmatprep.subr.mxu0 0.0
  %2409 = vmatpush1.msra.mxu0 0.0
  %2410 = vmatprep.subr.mxu0 0.0
  %2411 = vmatpush1.msra.mxu0 0.0
  %2412 = vmatprep.mubr.f32.mxu0 0.0
  %2413 = vmatmul.mubr.f32.gmra.mrb[0].mxu0 %v2346
  %v2414 = vpop.f32.mrb[0].mxu0
  %v2415 = vadd.f32 %v2323, %v2414
  %v2416 = vpop.f32.mrb[0].mxu0
  %2417 = vdwg.mxu0
  %v2418 = vld [vmem:[%s7] sm:$0x1]
  %v2420 = vlaneseq
  %v2421 = vshrl.u32 %v2420, 7
  %v2422 = vsub.s32 0, %v2421
  %v2423 = vrot.slane %v2418, %v2422
  %v2425 = vadd.f32 %v2415, %v2423
  %2426 = vmax.xlane.f32.xlu0 %v2425
  %v2427 = vpop.xlane.xlu0 %2426
  %v2428 = vsub.f32 %v2425, %v2427
  %v2429 = vmul.f32 %v2428, 1.442695
  %v2430 = vpow.pop %v2429
  %2431 = vadd.xlane.f32.xlu0 %v2430
  %v2432 = vpop.xlane.xlu0 %2431
  %v2433 = vrcp.pop %v2432
  %v2434 = vmul.f32 %v2430, %v2433
  %2435 = vst [vmem:[%s8] sm:$0xff] %v2434
  // Predicated region
  $region34: #{cnn_forward.1} parent=0 // pred_check
    _
  $region35: #{cnn_forward.1} parent=0 // pred_check_branch
    %2437 = sbr.rel (0) target = $region37
  $region36: #{cnn_forward.1} parent=0 // pred_region
    _
  $region37: #{cnn_forward.1} parent=0 // pred_fallthru
    _
  // Predicated region
  $region38: #{cnn_forward.1} parent=0 // pred_check
    _
  $region39: #{cnn_forward.1} parent=0 // pred_check_branch
    %2439 = sbr.rel (0) target = $region41
  $region40: #{cnn_forward.1} parent=0 // pred_region
    _
  $region41: #{cnn_forward.1} parent=0 // pred_fallthru
    _

</llo_original>
